<compile_context>
chip_gen: v7x
topology: tpu7x:2x2x1
jax: 0.10.0
libtpu: 0.0.40
codegen_flags: <defaults>
</compile_context>

<pallas_src>
import functools

import jax
import jax.numpy as jnp
from jax.experimental import pallas as pl
from jax.experimental.pallas import tpu as pltpu

EPS = 1e-5


def _layernorm_kernel(x_ref, w_ref, o_ref):
    # x_ref: (tm, D) rows; w_ref: (1, D) f32 scale; o_ref: (tm, D)
    x = x_ref[...].astype(jnp.float32)
    w = w_ref[...]  # already f32 (cast hoisted to the wrapper)

    inv_d = jnp.float32(1.0 / x.shape[-1])
    mean = jnp.sum(x, axis=-1, keepdims=True) * inv_d
    xc = x - mean
    var = jnp.sum(xc * xc, axis=-1, keepdims=True) * inv_d  # two-pass variance
    inv = jax.lax.rsqrt(var + EPS)  # EUP

    o_ref[...] = (xc * inv * w).astype(o_ref.dtype)


def _layernorm_packed_kernel(x_ref, w_ref, seg_ref, segt_ref, o_ref, *, d):
    # k = 128 // d original rows packed into each lane-dense 128-wide row.
    # x_ref: (tm, 128); w_ref: (1, 128) = weight tiled k times;
    # seg_ref: (128, kp) 0/1 segment indicator; segt_ref: (kp, 128) transpose.
    x = x_ref[...].astype(jnp.float32)
    w = w_ref[...]
    seg = seg_ref[...]
    segt = segt_ref[...]

    inv_d = jnp.float32(1.0 / d)
    hi = jax.lax.Precision.HIGHEST  # exact f32: segmented sums must not drop to bf16

    # Segmented (per original row) reductions / broadcasts via the idle MXU.
    mean_seg = jnp.dot(x, seg, precision=hi,
                       preferred_element_type=jnp.float32) * inv_d      # (tm, kp)
    mean = jnp.dot(mean_seg, segt, precision=hi,
                   preferred_element_type=jnp.float32)                   # (tm, 128)
    xc = x - mean
    var_seg = jnp.dot(xc * xc, seg, precision=hi,
                      preferred_element_type=jnp.float32) * inv_d        # (tm, kp)
    inv_seg = jax.lax.rsqrt(var_seg + EPS)
    inv = jnp.dot(inv_seg, segt, precision=hi,
                  preferred_element_type=jnp.float32)                    # (tm, 128)

    o_ref[...] = (xc * inv * w).astype(o_ref.dtype)


def _pick_tile(rows, D, in_bytes, out_bytes, *, budget_bytes=20 << 20, tm_cap=1024):
    """Row tile: big enough to amortize per-step overhead, small enough that
    double-buffered I/O + in-kernel f32 temporaries stay well inside v7x's
    VMEM, and small enough to leave >= 2 grid steps for megacore sharding."""
    mult = max(8, 32 // min(in_bytes, out_bytes))  # sublane-packing multiple
    # Per-row VMEM: double-buffered input+output tiles plus ~3 full-tile f32
    # temporaries the kernel materializes (f32 cast, centered xc, square).
    per_row = D * (2 * (in_bytes + out_bytes) + 3 * 4)
    tm = max(mult, min(tm_cap, budget_bytes // max(per_row, 1)))
    tm = (tm // mult) * mult
    rows_up = ((rows + mult - 1) // mult) * mult
    # Guarantee >= 2 grid steps when possible so the "parallel" row axis can
    # shard across both v7x TensorCores (harmless on 1-TC v5e/v6e).
    if rows_up >= 2 * mult:
        half = ((rows_up // 2 + mult - 1) // mult) * mult
        tm = min(tm, half)
    tm = min(tm, rows_up)
    return max(tm, mult)


def layer_norm(x, weight, *, tm=None, out_dtype=None):
    """x: (B, S, D) float; weight: (D,). Normalizes over D, scales by weight."""
    B, S, D = x.shape
    rows = B * S

    if out_dtype is None:
        out_dtype = jnp.float32  # F.layer_norm(x.float()) * f32 weight -> f32
    out_dtype = jnp.dtype(out_dtype)
    if out_dtype.itemsize > 4:
        out_dtype = jnp.dtype(jnp.float32)  # never f64 on TPU

    w32 = weight.astype(jnp.float32)  # hoisted cast (once, not per grid step)
    x2 = x.reshape(rows, D)

    # Lane-dense small-D path: pack k = 128//D rows per 128-lane row.
    k = (128 // D) if D < 128 else 1
    packed = D < 128 and (128 % D == 0) and (rows % k == 0)
    if packed:
        d_eff = k * D  # == 128
        rows_eff = rows // k
        x_call = x2.reshape(rows_eff, d_eff)             # free row-major reshape
        w_call = jnp.tile(w32, (k,)).reshape(1, d_eff)
        kp = ((k + 7) // 8) * 8                          # pad indicator to 8 cols
        seg_id = jnp.arange(d_eff, dtype=jnp.int32) // D
        seg = (seg_id[:, None] == jnp.arange(kp, dtype=jnp.int32)[None, :]
               ).astype(jnp.float32)                     # (128, kp)
        segt = seg.T                                     # (kp, 128)
        kernel = functools.partial(_layernorm_packed_kernel, d=D)
    else:
        d_eff = D
        rows_eff = rows
        x_call = x2
        w_call = w32.reshape(1, D)
        kernel = _layernorm_kernel

    in_bytes = jnp.dtype(x.dtype).itemsize
    out_bytes = out_dtype.itemsize
    tm_eff = tm if tm is not None else _pick_tile(rows_eff, d_eff, in_bytes, out_bytes)

    # No padding / slicing: ceil-divided grid; Pallas masks the ragged last
    # block on writeback and rows are independent, so OOB garbage is harmless.
    grid = (pl.cdiv(rows_eff, tm_eff),)

    # VMEM: double-buffered I/O tiles + ~3 f32 in-kernel temporaries + small
    # constant rows, with headroom.  Default tile budget keeps this ~32 MiB
    # (raises v5e's 16 MiB scoped default, well under v7x's 64 MiB physical).
    tile_bytes = tm_eff * d_eff * (2 * (in_bytes + out_bytes) + 3 * 4) + 8 * d_eff * 4
    vmem_limit = max(int(tile_bytes * 1.25) + (2 << 20), 32 << 20)

    if packed:
        in_specs = [
            pl.BlockSpec((tm_eff, d_eff), lambda i: (i, 0)),
            pl.BlockSpec((1, d_eff), lambda i: (0, 0)),
            pl.BlockSpec((d_eff, kp), lambda i: (0, 0)),
            pl.BlockSpec((kp, d_eff), lambda i: (0, 0)),
        ]
        args = (x_call, w_call, seg, segt)
    else:
        in_specs = [
            pl.BlockSpec((tm_eff, d_eff), lambda i: (i, 0)),
            pl.BlockSpec((1, d_eff), lambda i: (0, 0)),
        ]
        args = (x_call, w_call)

    out = pl.pallas_call(
        kernel,
        out_shape=jax.ShapeDtypeStruct((rows_eff, d_eff), out_dtype),
        grid_spec=pltpu.PrefetchScalarGridSpec(
            num_scalar_prefetch=0,
            grid=grid,
            in_specs=in_specs,
            out_specs=pl.BlockSpec((tm_eff, d_eff), lambda i: (i, 0)),
        ),
        compiler_params=pltpu.CompilerParams(
            dimension_semantics=("parallel",),
            vmem_limit_bytes=int(vmem_limit),
        ),
    )(*args)

    return out.reshape(B, S, D)


def layer_norm_ref(x, weight):
    x = x.astype(jnp.float32)
    mean = jnp.mean(x, axis=-1, keepdims=True)
    var = jnp.mean((x - mean) ** 2, axis=-1, keepdims=True)
    normed = (x - mean) * jax.lax.rsqrt(var + EPS)
    return normed * weight[None, None, :].astype(jnp.float32)


if __name__ == "__main__":
    key = jax.random.PRNGKey(0)
    kx, kw = jax.random.split(key)

    # Test 1: small-D path (D=32 -> lane-dense packed kernel), module-style (B,S,D).
    B, S, D = 2, 8, 32
    x = jax.random.normal(kx, (B, S, D), dtype=jnp.float32)
    weight = 1.0 + 0.1 * jax.random.normal(kw, (D,), dtype=jnp.float32)

    out = layer_norm(x, weight)
    jax.block_until_ready(out)
    ref = layer_norm_ref(x, weight)
    assert out.shape == (B, S, D) and out.dtype == jnp.float32
    assert jnp.allclose(out, ref, atol=2e-5, rtol=2e-5)

    # Test 2: bf16 input, D = 128, row count not divisible by the tile
    # (exercises the pad-free ragged last block and the standard kernel).
    B2, S2, D2 = 3, 5, 128
    x2 = jax.random.normal(jax.random.PRNGKey(1), (B2, S2, D2), dtype=jnp.bfloat16)
    w2 = jnp.ones((D2,), dtype=jnp.float32)
    out2 = layer_norm(x2, w2)
    jax.block_until_ready(out2)
    ref2 = layer_norm_ref(x2, w2)
    assert out2.shape == (B2, S2, D2) and out2.dtype == jnp.float32
    assert jnp.allclose(out2, ref2, atol=1e-4, rtol=1e-4)

    print("KERNEL_OK")
</pallas_src>

<mosaic_0001>
module attributes {stable_mosaic.version = 11 : i64} {
  func.func @_layernorm_packed_kernel(%arg0: i32, %arg1: memref<8x128xf32, #tpu.memory_space<vmem>>, %arg2: memref<1x128xf32, #tpu.memory_space<vmem>>, %arg3: memref<128x8xf32, #tpu.memory_space<vmem>>, %arg4: memref<8x128xf32, #tpu.memory_space<vmem>>, %arg5: memref<8x128xf32, #tpu.memory_space<vmem>>) attributes {dimension_semantics = [#tpu.dimension_semantics<parallel>], iteration_bounds = array<i64: 1>, scalar_prefetch = 0 : i64, scratch_operands = 0 : i64, tpu.core_type = #tpu.core_type<tc>, window_params = [{transform_indices = @transform_0, window_bounds = array<i64: 8, 128>}, {pipeline_mode = #tpu.pipeline_mode<synchronous>, transform_indices = @transform_1, window_bounds = array<i64: 1, 128>}, {pipeline_mode = #tpu.pipeline_mode<synchronous>, transform_indices = @transform_2, window_bounds = array<i64: 128, 8>}, {pipeline_mode = #tpu.pipeline_mode<synchronous>, transform_indices = @transform_3, window_bounds = array<i64: 8, 128>}, {transform_indices = @transform_4, window_bounds = array<i64: 8, 128>}]} {
    %c0 = arith.constant 0 : index
    %c0_0 = arith.constant 0 : index
    %0 = vector.load %arg1[%c0, %c0_0] : memref<8x128xf32, #tpu.memory_space<vmem>>, vector<8x128xf32>
    %c0_1 = arith.constant 0 : index
    %c0_2 = arith.constant 0 : index
    %1 = vector.load %arg2[%c0_1, %c0_2] : memref<1x128xf32, #tpu.memory_space<vmem>>, vector<1x128xf32>
    %c0_3 = arith.constant 0 : index
    %c0_4 = arith.constant 0 : index
    %2 = vector.load %arg3[%c0_3, %c0_4] : memref<128x8xf32, #tpu.memory_space<vmem>>, vector<128x8xf32>
    %c0_5 = arith.constant 0 : index
    %c0_6 = arith.constant 0 : index
    %3 = vector.load %arg4[%c0_5, %c0_6] : memref<8x128xf32, #tpu.memory_space<vmem>>, vector<8x128xf32>
    %cst = arith.constant dense<0.000000e+00> : vector<8x8xf32>
    %4 = tpu.matmul %0, %2, %cst {dimension_numbers = #tpu.dot_dimension_numbers<[1], [0], [0], [1], [0, 0, 1, 1], [], []>, precision = #tpu.contract_precision<fp32>} : vector<8x128xf32>, vector<128x8xf32>, vector<8x8xf32> -> vector<8x8xf32>
    %cst_7 = arith.constant 3.125000e-02 : f32
    %5 = vector.broadcast %cst_7 : f32 to vector<8x8xf32>
    %6 = arith.mulf %4, %5 : vector<8x8xf32>
    %cst_8 = arith.constant dense<0.000000e+00> : vector<8x128xf32>
    %7 = tpu.matmul %6, %3, %cst_8 {dimension_numbers = #tpu.dot_dimension_numbers<[1], [0], [0], [1], [0, 0, 1, 1], [], []>, precision = #tpu.contract_precision<fp32>} : vector<8x8xf32>, vector<8x128xf32>, vector<8x128xf32> -> vector<8x128xf32>
    %8 = arith.subf %0, %7 : vector<8x128xf32>
    %9 = arith.mulf %8, %8 : vector<8x128xf32>
    %cst_9 = arith.constant dense<0.000000e+00> : vector<8x8xf32>
    %10 = tpu.matmul %9, %2, %cst_9 {dimension_numbers = #tpu.dot_dimension_numbers<[1], [0], [0], [1], [0, 0, 1, 1], [], []>, precision = #tpu.contract_precision<fp32>} : vector<8x128xf32>, vector<128x8xf32>, vector<8x8xf32> -> vector<8x8xf32>
    %cst_10 = arith.constant 3.125000e-02 : f32
    %11 = vector.broadcast %cst_10 : f32 to vector<8x8xf32>
    %12 = arith.mulf %10, %11 : vector<8x8xf32>
    %cst_11 = arith.constant 9.99999974E-6 : f32
    %13 = vector.broadcast %cst_11 : f32 to vector<8x8xf32>
    %14 = arith.addf %12, %13 : vector<8x8xf32>
    %15 = math.rsqrt %14 : vector<8x8xf32>
    %cst_12 = arith.constant dense<0.000000e+00> : vector<8x128xf32>
    %16 = tpu.matmul %15, %3, %cst_12 {dimension_numbers = #tpu.dot_dimension_numbers<[1], [0], [0], [1], [0, 0, 1, 1], [], []>, precision = #tpu.contract_precision<fp32>} : vector<8x8xf32>, vector<8x128xf32>, vector<8x128xf32> -> vector<8x128xf32>
    %17 = arith.mulf %8, %16 : vector<8x128xf32>
    %18 = vector.broadcast %1 : vector<1x128xf32> to vector<8x128xf32>
    %19 = arith.mulf %17, %18 : vector<8x128xf32>
    %c0_13 = arith.constant 0 : index
    %c0_14 = arith.constant 0 : index
    %20 = vector.load %arg5[%c0_13, %c0_14] : memref<8x128xf32, #tpu.memory_space<vmem>>, vector<8x128xf32>
    tpu.vector_store %arg5[%c0_13, %c0_14], %19 {strides = array<i32>} : memref<8x128xf32, #tpu.memory_space<vmem>>, vector<8x128xf32>,
    return
  }
  func.func @transform_0(%arg0: i32) -> (i32, i32) {
    %c0_i32 = arith.constant 0 : i32
    %c0_i32_0 = arith.constant 0 : i32
    return %arg0, %c0_i32 : i32, i32
  }
  func.func @transform_1(%arg0: i32) -> (i32, i32) {
    %c0_i32 = arith.constant 0 : i32
    %c0_i32_0 = arith.constant 0 : i32
    %c0_i32_1 = arith.constant 0 : i32
    return %c0_i32, %c0_i32_0 : i32, i32
  }
  func.func @transform_2(%arg0: i32) -> (i32, i32) {
    %c0_i32 = arith.constant 0 : i32
    %c0_i32_0 = arith.constant 0 : i32
    %c0_i32_1 = arith.constant 0 : i32
    return %c0_i32, %c0_i32_0 : i32, i32
  }
  func.func @transform_3(%arg0: i32) -> (i32, i32) {
    %c0_i32 = arith.constant 0 : i32
    %c0_i32_0 = arith.constant 0 : i32
    %c0_i32_1 = arith.constant 0 : i32
    return %c0_i32, %c0_i32_0 : i32, i32
  }
  func.func @transform_4(%arg0: i32) -> (i32, i32) {
    %c0_i32 = arith.constant 0 : i32
    %c0_i32_0 = arith.constant 0 : i32
    return %arg0, %c0_i32 : i32, i32
  }
}

</mosaic_0001>

<llo_original>
// kernel: tpu_custom_call.1
$region0: #{tpu_custom_call.1}
  #allocation0 [shape = 'u32[]', space=smem, size = 0x4, offset = 0x4, fixed_abs, tag = 'smem constant byte address 0x4 - core index']
  #allocation1 [shape = 'u32[144,128]{1,0:T(1,128)}', space=vmem, size = 0x12000, scoped, tag = 'internal scratch']
  %s0 = inlined_call_operand.vmem [shape: f32[4,128], index: 0, kind: input, shape index: {}]
  %s1 = inlined_call_operand.vmem [shape: f32[1,128], index: 1, kind: input, shape index: {}]
  %s2 = inlined_call_operand.vmem [shape: f32[128,8], index: 2, kind: input, shape index: {}]
  %s3 = inlined_call_operand.vmem [shape: f32[8,128], index: 3, kind: input, shape index: {}]
  %s4 = inlined_call_operand.hbm [shape: f32[4,128], index: 4, kind: output, shape index: {}]
  %s5 = sld [smem:[#allocation0]]
  $region26: #{tpu_custom_call.1} parent=0
    _
  %s7 = ssub.s32 1, %s5
  %s8 = scalar_select 0, %s7, %s5
  $region1: #{tpu_custom_call.1} parent=0
    #allocation2 [shape = 'u8[4096]{0}', space=vmem, size = 0x1000, scoped, tag = 'output window, operand 0, single buffered']
    #allocation3 [shape = 's32[1]{0}', space=sflag, size = 0x4, scoped, tag = 'scoped memory for tpu_custom_call.1']
    %9 = vsyncpa [#allocation3], 0
    // Predicated region
    $region2: #{tpu_custom_call.1} parent=1 // pred_check
      _
    $region3: #{tpu_custom_call.1} parent=1 // pred_check_branch
      %11 = sbr.rel (0) target = $region5
    $region4: #{tpu_custom_call.1} parent=1 // pred_region
      _
    $region5: #{tpu_custom_call.1} parent=1 // pred_fallthru
      _
    // Predicated region
    $region6: #{tpu_custom_call.1} parent=1 // pred_check
      _
    $region7: #{tpu_custom_call.1} parent=1 // pred_check_branch
      %13 = sbr.rel (0) target = $region9
    $region8: #{tpu_custom_call.1} parent=1 // pred_region
      _
    $region9: #{tpu_custom_call.1} parent=1 // pred_fallthru
      _
    // Predicated region
    $region10: #{tpu_custom_call.1} parent=1 // pred_check
      _
    $region11: #{tpu_custom_call.1} parent=1 // pred_check_branch
      %15 = sbr.rel (0) target = $region13
    $region12: #{tpu_custom_call.1} parent=1 // pred_region
      _
    $region13: #{tpu_custom_call.1} parent=1 // pred_fallthru
      _
    // Predicated region
    $region14: #{tpu_custom_call.1} parent=1 // pred_check
      _
    $region15: #{tpu_custom_call.1} parent=1 // pred_check_branch
      %17 = sbr.rel (0) target = $region17
    $region16: #{tpu_custom_call.1} parent=1 // pred_region
      _
    $region17: #{tpu_custom_call.1} parent=1 // pred_fallthru
      _
    %v18 = vld [vmem:[%s0] sm:$0xff]
    %v19 = vld [vmem:[%s1] sm:$0x1]
    %v20 = vld [vmem:[%s2] sm:$0xff]
    %v21 = vld [vmem:[%s2 + $0x8] sm:$0xff]
    %v22 = vld [vmem:[%s2 + $0x10] sm:$0xff]
    %v23 = vld [vmem:[%s2 + $0x18] sm:$0xff]
    %v24 = vld [vmem:[%s2 + $0x20] sm:$0xff]
    %v25 = vld [vmem:[%s2 + $0x28] sm:$0xff]
    %v26 = vld [vmem:[%s2 + $0x30] sm:$0xff]
    %v27 = vld [vmem:[%s2 + $0x38] sm:$0xff]
    %v28 = vld [vmem:[%s2 + $0x40] sm:$0xff]
    %v29 = vld [vmem:[%s2 + $0x48] sm:$0xff]
    %v30 = vld [vmem:[%s2 + $0x50] sm:$0xff]
    %v31 = vld [vmem:[%s2 + $0x58] sm:$0xff]
    %v32 = vld [vmem:[%s2 + $0x60] sm:$0xff]
    %v33 = vld [vmem:[%s2 + $0x68] sm:$0xff]
    %v34 = vld [vmem:[%s2 + $0x70] sm:$0xff]
    %v35 = vld [vmem:[%s2 + $0x78] sm:$0xff]
    %v36 = vld [vmem:[%s3] sm:$0xff]
    %37 = vmatprep.subr.mxu0 0.0
    %v38 = vand.u32 %v20, 4294901760
    %39 = vmatpush1.msra.mxu0 %v38
    %40 = vmatprep.subr.mxu0 0.0
    %v41 = vand.u32 %v21, 4294901760
    %42 = vmatpush1.msra.mxu0 %v41
    %43 = vmatprep.subr.mxu0 0.0
    %v44 = vand.u32 %v22, 4294901760
    %45 = vmatpush1.msra.mxu0 %v44
    %46 = vmatprep.subr.mxu0 0.0
    %v47 = vand.u32 %v23, 4294901760
    %48 = vmatpush1.msra.mxu0 %v47
    %49 = vmatprep.subr.mxu0 0.0
    %v50 = vand.u32 %v24, 4294901760
    %51 = vmatpush1.msra.mxu0 %v50
    %52 = vmatprep.subr.mxu0 0.0
    %v53 = vand.u32 %v25, 4294901760
    %54 = vmatpush1.msra.mxu0 %v53
    %55 = vmatprep.subr.mxu0 0.0
    %v56 = vand.u32 %v26, 4294901760
    %57 = vmatpush1.msra.mxu0 %v56
    %58 = vmatprep.subr.mxu0 0.0
    %v59 = vand.u32 %v27, 4294901760
    %60 = vmatpush1.msra.mxu0 %v59
    %61 = vmatprep.subr.mxu0 0.0
    %v62 = vand.u32 %v28, 4294901760
    %63 = vmatpush1.msra.mxu0 %v62
    %64 = vmatprep.subr.mxu0 0.0
    %v65 = vand.u32 %v29, 4294901760
    %66 = vmatpush1.msra.mxu0 %v65
    %67 = vmatprep.subr.mxu0 0.0
    %v68 = vand.u32 %v30, 4294901760
    %69 = vmatpush1.msra.mxu0 %v68
    %70 = vmatprep.subr.mxu0 0.0
    %v71 = vand.u32 %v31, 4294901760
    %72 = vmatpush1.msra.mxu0 %v71
    %73 = vmatprep.subr.mxu0 0.0
    %v74 = vand.u32 %v32, 4294901760
    %75 = vmatpush1.msra.mxu0 %v74
    %76 = vmatprep.subr.mxu0 0.0
    %v77 = vand.u32 %v33, 4294901760
    %78 = vmatpush1.msra.mxu0 %v77
    %79 = vmatprep.subr.mxu0 0.0
    %v80 = vand.u32 %v34, 4294901760
    %81 = vmatpush1.msra.mxu0 %v80
    %82 = vmatprep.subr.mxu0 0.0
    %v83 = vand.u32 %v35, 4294901760
    %84 = vmatpush1.msra.mxu0 %v83
    %85 = vmatprep.subr.mxu0 0.0
    %86 = vmatpush1.msra.mxu0 0.0
    %87 = vmatprep.subr.mxu0 0.0
    %88 = vmatpush1.msra.mxu0 0.0
    %89 = vmatprep.subr.mxu0 0.0
    %90 = vmatpush1.msra.mxu0 0.0
    %91 = vmatprep.subr.mxu0 0.0
    %92 = vmatpush1.msra.mxu0 0.0
    %93 = vmatprep.subr.mxu0 0.0
    %94 = vmatpush1.msra.mxu0 0.0
    %95 = vmatprep.subr.mxu0 0.0
    %96 = vmatpush1.msra.mxu0 0.0
    %97 = vmatprep.subr.mxu0 0.0
    %98 = vmatpush1.msra.mxu0 0.0
    %99 = vmatprep.subr.mxu0 0.0
    %100 = vmatpush1.msra.mxu0 0.0
    %101 = vmatprep.subr.mxu0 0.0
    %102 = vmatpush1.msra.mxu0 0.0
    %103 = vmatprep.subr.mxu0 0.0
    %104 = vmatpush1.msra.mxu0 0.0
    %105 = vmatprep.subr.mxu0 0.0
    %106 = vmatpush1.msra.mxu0 0.0
    %107 = vmatprep.subr.mxu0 0.0
    %108 = vmatpush1.msra.mxu0 0.0
    %109 = vmatprep.subr.mxu0 0.0
    %110 = vmatpush1.msra.mxu0 0.0
    %111 = vmatprep.subr.mxu0 0.0
    %112 = vmatpush1.msra.mxu0 0.0
    %113 = vmatprep.subr.mxu0 0.0
    %114 = vmatpush1.msra.mxu0 0.0
    %115 = vmatprep.subr.mxu0 0.0
    %116 = vmatpush1.msra.mxu0 0.0
    %117 = vmatprep.mubr.f32.mxu0 0.0
    %v118 = vand.u32 %v18, 4294901760
    %v119 = vsub.f32 %v18, %v118
    %v120 = vand.u32 %v119, 4294901760
    %v121 = vsub.f32 %v119, %v120
    %v122 = vand.u32 %v121, 4294901760
    %123 = vmatmul.mubr.f32.gmra.mrb[0].mxu0 %v122
    %v124 = vpop.f32.mrb[0].mxu0
    %v125 = vadd.f32 0.0, %v124
    %v126 = vpop.f32.mrb[0].mxu0
    %127 = vdwg.mxu0
    %128 = vmatprep.subr.mxu0 0.0
    %v129 = vand.u32 %v20, 4294901760
    %v130 = vsub.f32 %v20, %v129
    %v131 = vand.u32 %v130, 4294901760
    %v132 = vsub.f32 %v130, %v131
    %v133 = vand.u32 %v132, 4294901760
    %134 = vmatpush1.msra.mxu0 %v133
    %135 = vmatprep.subr.mxu0 0.0
    %v136 = vand.u32 %v21, 4294901760
    %v137 = vsub.f32 %v21, %v136
    %v138 = vand.u32 %v137, 4294901760
    %v139 = vsub.f32 %v137, %v138
    %v140 = vand.u32 %v139, 4294901760
    %141 = vmatpush1.msra.mxu0 %v140
    %142 = vmatprep.subr.mxu0 0.0
    %v143 = vand.u32 %v22, 4294901760
    %v144 = vsub.f32 %v22, %v143
    %v145 = vand.u32 %v144, 4294901760
    %v146 = vsub.f32 %v144, %v145
    %v147 = vand.u32 %v146, 4294901760
    %148 = vmatpush1.msra.mxu0 %v147
    %149 = vmatprep.subr.mxu0 0.0
    %v150 = vand.u32 %v23, 4294901760
    %v151 = vsub.f32 %v23, %v150
    %v152 = vand.u32 %v151, 4294901760
    %v153 = vsub.f32 %v151, %v152
    %v154 = vand.u32 %v153, 4294901760
    %155 = vmatpush1.msra.mxu0 %v154
    %156 = vmatprep.subr.mxu0 0.0
    %v157 = vand.u32 %v24, 4294901760
    %v158 = vsub.f32 %v24, %v157
    %v159 = vand.u32 %v158, 4294901760
    %v160 = vsub.f32 %v158, %v159
    %v161 = vand.u32 %v160, 4294901760
    %162 = vmatpush1.msra.mxu0 %v161
    %163 = vmatprep.subr.mxu0 0.0
    %v164 = vand.u32 %v25, 4294901760
    %v165 = vsub.f32 %v25, %v164
    %v166 = vand.u32 %v165, 4294901760
    %v167 = vsub.f32 %v165, %v166
    %v168 = vand.u32 %v167, 4294901760
    %169 = vmatpush1.msra.mxu0 %v168
    %170 = vmatprep.subr.mxu0 0.0
    %v171 = vand.u32 %v26, 4294901760
    %v172 = vsub.f32 %v26, %v171
    %v173 = vand.u32 %v172, 4294901760
    %v174 = vsub.f32 %v172, %v173
    %v175 = vand.u32 %v174, 4294901760
    %176 = vmatpush1.msra.mxu0 %v175
    %177 = vmatprep.subr.mxu0 0.0
    %v178 = vand.u32 %v27, 4294901760
    %v179 = vsub.f32 %v27, %v178
    %v180 = vand.u32 %v179, 4294901760
    %v181 = vsub.f32 %v179, %v180
    %v182 = vand.u32 %v181, 4294901760
    %183 = vmatpush1.msra.mxu0 %v182
    %184 = vmatprep.subr.mxu0 0.0
    %v185 = vand.u32 %v28, 4294901760
    %v186 = vsub.f32 %v28, %v185
    %v187 = vand.u32 %v186, 4294901760
    %v188 = vsub.f32 %v186, %v187
    %v189 = vand.u32 %v188, 4294901760
    %190 = vmatpush1.msra.mxu0 %v189
    %191 = vmatprep.subr.mxu0 0.0
    %v192 = vand.u32 %v29, 4294901760
    %v193 = vsub.f32 %v29, %v192
    %v194 = vand.u32 %v193, 4294901760
    %v195 = vsub.f32 %v193, %v194
    %v196 = vand.u32 %v195, 4294901760
    %197 = vmatpush1.msra.mxu0 %v196
    %198 = vmatprep.subr.mxu0 0.0
    %v199 = vand.u32 %v30, 4294901760
    %v200 = vsub.f32 %v30, %v199
    %v201 = vand.u32 %v200, 4294901760
    %v202 = vsub.f32 %v200, %v201
    %v203 = vand.u32 %v202, 4294901760
    %204 = vmatpush1.msra.mxu0 %v203
    %205 = vmatprep.subr.mxu0 0.0
    %v206 = vand.u32 %v31, 4294901760
    %v207 = vsub.f32 %v31, %v206
    %v208 = vand.u32 %v207, 4294901760
    %v209 = vsub.f32 %v207, %v208
    %v210 = vand.u32 %v209, 4294901760
    %211 = vmatpush1.msra.mxu0 %v210
    %212 = vmatprep.subr.mxu0 0.0
    %v213 = vand.u32 %v32, 4294901760
    %v214 = vsub.f32 %v32, %v213
    %v215 = vand.u32 %v214, 4294901760
    %v216 = vsub.f32 %v214, %v215
    %v217 = vand.u32 %v216, 4294901760
    %218 = vmatpush1.msra.mxu0 %v217
    %219 = vmatprep.subr.mxu0 0.0
    %v220 = vand.u32 %v33, 4294901760
    %v221 = vsub.f32 %v33, %v220
    %v222 = vand.u32 %v221, 4294901760
    %v223 = vsub.f32 %v221, %v222
    %v224 = vand.u32 %v223, 4294901760
    %225 = vmatpush1.msra.mxu0 %v224
    %226 = vmatprep.subr.mxu0 0.0
    %v227 = vand.u32 %v34, 4294901760
    %v228 = vsub.f32 %v34, %v227
    %v229 = vand.u32 %v228, 4294901760
    %v230 = vsub.f32 %v228, %v229
    %v231 = vand.u32 %v230, 4294901760
    %232 = vmatpush1.msra.mxu0 %v231
    %233 = vmatprep.subr.mxu0 0.0
    %v234 = vand.u32 %v35, 4294901760
    %v235 = vsub.f32 %v35, %v234
    %v236 = vand.u32 %v235, 4294901760
    %v237 = vsub.f32 %v235, %v236
    %v238 = vand.u32 %v237, 4294901760
    %239 = vmatpush1.msra.mxu0 %v238
    %240 = vmatprep.subr.mxu0 0.0
    %241 = vmatpush1.msra.mxu0 0.0
    %242 = vmatprep.subr.mxu0 0.0
    %243 = vmatpush1.msra.mxu0 0.0
    %244 = vmatprep.subr.mxu0 0.0
    %245 = vmatpush1.msra.mxu0 0.0
    %246 = vmatprep.subr.mxu0 0.0
    %247 = vmatpush1.msra.mxu0 0.0
    %248 = vmatprep.subr.mxu0 0.0
    %249 = vmatpush1.msra.mxu0 0.0
    %250 = vmatprep.subr.mxu0 0.0
    %251 = vmatpush1.msra.mxu0 0.0
    %252 = vmatprep.subr.mxu0 0.0
    %253 = vmatpush1.msra.mxu0 0.0
    %254 = vmatprep.subr.mxu0 0.0
    %255 = vmatpush1.msra.mxu0 0.0
    %256 = vmatprep.subr.mxu0 0.0
    %257 = vmatpush1.msra.mxu0 0.0
    %258 = vmatprep.subr.mxu0 0.0
    %259 = vmatpush1.msra.mxu0 0.0
    %260 = vmatprep.subr.mxu0 0.0
    %261 = vmatpush1.msra.mxu0 0.0
    %262 = vmatprep.subr.mxu0 0.0
    %263 = vmatpush1.msra.mxu0 0.0
    %264 = vmatprep.subr.mxu0 0.0
    %265 = vmatpush1.msra.mxu0 0.0
    %266 = vmatprep.subr.mxu0 0.0
    %267 = vmatpush1.msra.mxu0 0.0
    %268 = vmatprep.subr.mxu0 0.0
    %269 = vmatpush1.msra.mxu0 0.0
    %270 = vmatprep.subr.mxu0 0.0
    %271 = vmatpush1.msra.mxu0 0.0
    %272 = vmatprep.mubr.f32.mxu0 0.0
    %v273 = vand.u32 %v18, 4294901760
    %274 = vmatmul.mubr.f32.gmra.mrb[0].mxu0 %v273
    %v275 = vpop.f32.mrb[0].mxu0
    %v276 = vadd.f32 %v125, %v275
    %v277 = vpop.f32.mrb[0].mxu0
    %278 = vdwg.mxu0
    %279 = vmatprep.subr.mxu0 0.0
    %v280 = vand.u32 %v20, 4294901760
    %v281 = vsub.f32 %v20, %v280
    %282 = vmatpush1.msra.mxu0 %v281
    %283 = vmatprep.subr.mxu0 0.0
    %v284 = vand.u32 %v21, 4294901760
    %v285 = vsub.f32 %v21, %v284
    %286 = vmatpush1.msra.mxu0 %v285
    %287 = vmatprep.subr.mxu0 0.0
    %v288 = vand.u32 %v22, 4294901760
    %v289 = vsub.f32 %v22, %v288
    %290 = vmatpush1.msra.mxu0 %v289
    %291 = vmatprep.subr.mxu0 0.0
    %v292 = vand.u32 %v23, 4294901760
    %v293 = vsub.f32 %v23, %v292
    %294 = vmatpush1.msra.mxu0 %v293
    %295 = vmatprep.subr.mxu0 0.0
    %v296 = vand.u32 %v24, 4294901760
    %v297 = vsub.f32 %v24, %v296
    %298 = vmatpush1.msra.mxu0 %v297
    %299 = vmatprep.subr.mxu0 0.0
    %v300 = vand.u32 %v25, 4294901760
    %v301 = vsub.f32 %v25, %v300
    %302 = vmatpush1.msra.mxu0 %v301
    %303 = vmatprep.subr.mxu0 0.0
    %v304 = vand.u32 %v26, 4294901760
    %v305 = vsub.f32 %v26, %v304
    %306 = vmatpush1.msra.mxu0 %v305
    %307 = vmatprep.subr.mxu0 0.0
    %v308 = vand.u32 %v27, 4294901760
    %v309 = vsub.f32 %v27, %v308
    %310 = vmatpush1.msra.mxu0 %v309
    %311 = vmatprep.subr.mxu0 0.0
    %v312 = vand.u32 %v28, 4294901760
    %v313 = vsub.f32 %v28, %v312
    %314 = vmatpush1.msra.mxu0 %v313
    %315 = vmatprep.subr.mxu0 0.0
    %v316 = vand.u32 %v29, 4294901760
    %v317 = vsub.f32 %v29, %v316
    %318 = vmatpush1.msra.mxu0 %v317
    %319 = vmatprep.subr.mxu0 0.0
    %v320 = vand.u32 %v30, 4294901760
    %v321 = vsub.f32 %v30, %v320
    %322 = vmatpush1.msra.mxu0 %v321
    %323 = vmatprep.subr.mxu0 0.0
    %v324 = vand.u32 %v31, 4294901760
    %v325 = vsub.f32 %v31, %v324
    %326 = vmatpush1.msra.mxu0 %v325
    %327 = vmatprep.subr.mxu0 0.0
    %v328 = vand.u32 %v32, 4294901760
    %v329 = vsub.f32 %v32, %v328
    %330 = vmatpush1.msra.mxu0 %v329
    %331 = vmatprep.subr.mxu0 0.0
    %v332 = vand.u32 %v33, 4294901760
    %v333 = vsub.f32 %v33, %v332
    %334 = vmatpush1.msra.mxu0 %v333
    %335 = vmatprep.subr.mxu0 0.0
    %v336 = vand.u32 %v34, 4294901760
    %v337 = vsub.f32 %v34, %v336
    %338 = vmatpush1.msra.mxu0 %v337
    %339 = vmatprep.subr.mxu0 0.0
    %v340 = vand.u32 %v35, 4294901760
    %v341 = vsub.f32 %v35, %v340
    %342 = vmatpush1.msra.mxu0 %v341
    %343 = vmatprep.subr.mxu0 0.0
    %344 = vmatpush1.msra.mxu0 0.0
    %345 = vmatprep.subr.mxu0 0.0
    %346 = vmatpush1.msra.mxu0 0.0
    %347 = vmatprep.subr.mxu0 0.0
    %348 = vmatpush1.msra.mxu0 0.0
    %349 = vmatprep.subr.mxu0 0.0
    %350 = vmatpush1.msra.mxu0 0.0
    %351 = vmatprep.subr.mxu0 0.0
    %352 = vmatpush1.msra.mxu0 0.0
    %353 = vmatprep.subr.mxu0 0.0
    %354 = vmatpush1.msra.mxu0 0.0
    %355 = vmatprep.subr.mxu0 0.0
    %356 = vmatpush1.msra.mxu0 0.0
    %357 = vmatprep.subr.mxu0 0.0
    %358 = vmatpush1.msra.mxu0 0.0
    %359 = vmatprep.subr.mxu0 0.0
    %360 = vmatpush1.msra.mxu0 0.0
    %361 = vmatprep.subr.mxu0 0.0
    %362 = vmatpush1.msra.mxu0 0.0
    %363 = vmatprep.subr.mxu0 0.0
    %364 = vmatpush1.msra.mxu0 0.0
    %365 = vmatprep.subr.mxu0 0.0
    %366 = vmatpush1.msra.mxu0 0.0
    %367 = vmatprep.subr.mxu0 0.0
    %368 = vmatpush1.msra.mxu0 0.0
    %369 = vmatprep.subr.mxu0 0.0
    %370 = vmatpush1.msra.mxu0 0.0
    %371 = vmatprep.subr.mxu0 0.0
    %372 = vmatpush1.msra.mxu0 0.0
    %373 = vmatprep.subr.mxu0 0.0
    %374 = vmatpush1.msra.mxu0 0.0
    %375 = vmatprep.mubr.f32.mxu0 0.0
    %v376 = vand.u32 %v18, 4294901760
    %v377 = vsub.f32 %v18, %v376
    %378 = vmatmul.mubr.f32.gmra.mrb[0].mxu0 %v377
    %v379 = vpop.f32.mrb[0].mxu0
    %v380 = vadd.f32 %v276, %v379
    %v381 = vpop.f32.mrb[0].mxu0
    %382 = vdwg.mxu0
    %383 = vmatprep.subr.mxu0 0.0
    %v384 = vand.u32 %v20, 4294901760
    %385 = vmatpush1.msra.mxu0 %v384
    %386 = vmatprep.subr.mxu0 0.0
    %v387 = vand.u32 %v21, 4294901760
    %388 = vmatpush1.msra.mxu0 %v387
    %389 = vmatprep.subr.mxu0 0.0
    %v390 = vand.u32 %v22, 4294901760
    %391 = vmatpush1.msra.mxu0 %v390
    %392 = vmatprep.subr.mxu0 0.0
    %v393 = vand.u32 %v23, 4294901760
    %394 = vmatpush1.msra.mxu0 %v393
    %395 = vmatprep.subr.mxu0 0.0
    %v396 = vand.u32 %v24, 4294901760
    %397 = vmatpush1.msra.mxu0 %v396
    %398 = vmatprep.subr.mxu0 0.0
    %v399 = vand.u32 %v25, 4294901760
    %400 = vmatpush1.msra.mxu0 %v399
    %401 = vmatprep.subr.mxu0 0.0
    %v402 = vand.u32 %v26, 4294901760
    %403 = vmatpush1.msra.mxu0 %v402
    %404 = vmatprep.subr.mxu0 0.0
    %v405 = vand.u32 %v27, 4294901760
    %406 = vmatpush1.msra.mxu0 %v405
    %407 = vmatprep.subr.mxu0 0.0
    %v408 = vand.u32 %v28, 4294901760
    %409 = vmatpush1.msra.mxu0 %v408
    %410 = vmatprep.subr.mxu0 0.0
    %v411 = vand.u32 %v29, 4294901760
    %412 = vmatpush1.msra.mxu0 %v411
    %413 = vmatprep.subr.mxu0 0.0
    %v414 = vand.u32 %v30, 4294901760
    %415 = vmatpush1.msra.mxu0 %v414
    %416 = vmatprep.subr.mxu0 0.0
    %v417 = vand.u32 %v31, 4294901760
    %418 = vmatpush1.msra.mxu0 %v417
    %419 = vmatprep.subr.mxu0 0.0
    %v420 = vand.u32 %v32, 4294901760
    %421 = vmatpush1.msra.mxu0 %v420
    %422 = vmatprep.subr.mxu0 0.0
    %v423 = vand.u32 %v33, 4294901760
    %424 = vmatpush1.msra.mxu0 %v423
    %425 = vmatprep.subr.mxu0 0.0
    %v426 = vand.u32 %v34, 4294901760
    %427 = vmatpush1.msra.mxu0 %v426
    %428 = vmatprep.subr.mxu0 0.0
    %v429 = vand.u32 %v35, 4294901760
    %430 = vmatpush1.msra.mxu0 %v429
    %431 = vmatprep.subr.mxu0 0.0
    %432 = vmatpush1.msra.mxu0 0.0
    %433 = vmatprep.subr.mxu0 0.0
    %434 = vmatpush1.msra.mxu0 0.0
    %435 = vmatprep.subr.mxu0 0.0
    %436 = vmatpush1.msra.mxu0 0.0
    %437 = vmatprep.subr.mxu0 0.0
    %438 = vmatpush1.msra.mxu0 0.0
    %439 = vmatprep.subr.mxu0 0.0
    %440 = vmatpush1.msra.mxu0 0.0
    %441 = vmatprep.subr.mxu0 0.0
    %442 = vmatpush1.msra.mxu0 0.0
    %443 = vmatprep.subr.mxu0 0.0
    %444 = vmatpush1.msra.mxu0 0.0
    %445 = vmatprep.subr.mxu0 0.0
    %446 = vmatpush1.msra.mxu0 0.0
    %447 = vmatprep.subr.mxu0 0.0
    %448 = vmatpush1.msra.mxu0 0.0
    %449 = vmatprep.subr.mxu0 0.0
    %450 = vmatpush1.msra.mxu0 0.0
    %451 = vmatprep.subr.mxu0 0.0
    %452 = vmatpush1.msra.mxu0 0.0
    %453 = vmatprep.subr.mxu0 0.0
    %454 = vmatpush1.msra.mxu0 0.0
    %455 = vmatprep.subr.mxu0 0.0
    %456 = vmatpush1.msra.mxu0 0.0
    %457 = vmatprep.subr.mxu0 0.0
    %458 = vmatpush1.msra.mxu0 0.0
    %459 = vmatprep.subr.mxu0 0.0
    %460 = vmatpush1.msra.mxu0 0.0
    %461 = vmatprep.subr.mxu0 0.0
    %462 = vmatpush1.msra.mxu0 0.0
    %463 = vmatprep.mubr.f32.mxu0 0.0
    %v464 = vand.u32 %v18, 4294901760
    %v465 = vsub.f32 %v18, %v464
    %v466 = vand.u32 %v465, 4294901760
    %467 = vmatmul.mubr.f32.gmra.mrb[0].mxu0 %v466
    %v468 = vpop.f32.mrb[0].mxu0
    %v469 = vadd.f32 %v380, %v468
    %v470 = vpop.f32.mrb[0].mxu0
    %471 = vdwg.mxu0
    %472 = vmatprep.subr.mxu0 0.0
    %v473 = vand.u32 %v20, 4294901760
    %v474 = vsub.f32 %v20, %v473
    %v475 = vand.u32 %v474, 4294901760
    %476 = vmatpush1.msra.mxu0 %v475
    %477 = vmatprep.subr.mxu0 0.0
    %v478 = vand.u32 %v21, 4294901760
    %v479 = vsub.f32 %v21, %v478
    %v480 = vand.u32 %v479, 4294901760
    %481 = vmatpush1.msra.mxu0 %v480
    %482 = vmatprep.subr.mxu0 0.0
    %v483 = vand.u32 %v22, 4294901760
    %v484 = vsub.f32 %v22, %v483
    %v485 = vand.u32 %v484, 4294901760
    %486 = vmatpush1.msra.mxu0 %v485
    %487 = vmatprep.subr.mxu0 0.0
    %v488 = vand.u32 %v23, 4294901760
    %v489 = vsub.f32 %v23, %v488
    %v490 = vand.u32 %v489, 4294901760
    %491 = vmatpush1.msra.mxu0 %v490
    %492 = vmatprep.subr.mxu0 0.0
    %v493 = vand.u32 %v24, 4294901760
    %v494 = vsub.f32 %v24, %v493
    %v495 = vand.u32 %v494, 4294901760
    %496 = vmatpush1.msra.mxu0 %v495
    %497 = vmatprep.subr.mxu0 0.0
    %v498 = vand.u32 %v25, 4294901760
    %v499 = vsub.f32 %v25, %v498
    %v500 = vand.u32 %v499, 4294901760
    %501 = vmatpush1.msra.mxu0 %v500
    %502 = vmatprep.subr.mxu0 0.0
    %v503 = vand.u32 %v26, 4294901760
    %v504 = vsub.f32 %v26, %v503
    %v505 = vand.u32 %v504, 4294901760
    %506 = vmatpush1.msra.mxu0 %v505
    %507 = vmatprep.subr.mxu0 0.0
    %v508 = vand.u32 %v27, 4294901760
    %v509 = vsub.f32 %v27, %v508
    %v510 = vand.u32 %v509, 4294901760
    %511 = vmatpush1.msra.mxu0 %v510
    %512 = vmatprep.subr.mxu0 0.0
    %v513 = vand.u32 %v28, 4294901760
    %v514 = vsub.f32 %v28, %v513
    %v515 = vand.u32 %v514, 4294901760
    %516 = vmatpush1.msra.mxu0 %v515
    %517 = vmatprep.subr.mxu0 0.0
    %v518 = vand.u32 %v29, 4294901760
    %v519 = vsub.f32 %v29, %v518
    %v520 = vand.u32 %v519, 4294901760
    %521 = vmatpush1.msra.mxu0 %v520
    %522 = vmatprep.subr.mxu0 0.0
    %v523 = vand.u32 %v30, 4294901760
    %v524 = vsub.f32 %v30, %v523
    %v525 = vand.u32 %v524, 4294901760
    %526 = vmatpush1.msra.mxu0 %v525
    %527 = vmatprep.subr.mxu0 0.0
    %v528 = vand.u32 %v31, 4294901760
    %v529 = vsub.f32 %v31, %v528
    %v530 = vand.u32 %v529, 4294901760
    %531 = vmatpush1.msra.mxu0 %v530
    %532 = vmatprep.subr.mxu0 0.0
    %v533 = vand.u32 %v32, 4294901760
    %v534 = vsub.f32 %v32, %v533
    %v535 = vand.u32 %v534, 4294901760
    %536 = vmatpush1.msra.mxu0 %v535
    %537 = vmatprep.subr.mxu0 0.0
    %v538 = vand.u32 %v33, 4294901760
    %v539 = vsub.f32 %v33, %v538
    %v540 = vand.u32 %v539, 4294901760
    %541 = vmatpush1.msra.mxu0 %v540
    %542 = vmatprep.subr.mxu0 0.0
    %v543 = vand.u32 %v34, 4294901760
    %v544 = vsub.f32 %v34, %v543
    %v545 = vand.u32 %v544, 4294901760
    %546 = vmatpush1.msra.mxu0 %v545
    %547 = vmatprep.subr.mxu0 0.0
    %v548 = vand.u32 %v35, 4294901760
    %v549 = vsub.f32 %v35, %v548
    %v550 = vand.u32 %v549, 4294901760
    %551 = vmatpush1.msra.mxu0 %v550
    %552 = vmatprep.subr.mxu0 0.0
    %553 = vmatpush1.msra.mxu0 0.0
    %554 = vmatprep.subr.mxu0 0.0
    %555 = vmatpush1.msra.mxu0 0.0
    %556 = vmatprep.subr.mxu0 0.0
    %557 = vmatpush1.msra.mxu0 0.0
    %558 = vmatprep.subr.mxu0 0.0
    %559 = vmatpush1.msra.mxu0 0.0
    %560 = vmatprep.subr.mxu0 0.0
    %561 = vmatpush1.msra.mxu0 0.0
    %562 = vmatprep.subr.mxu0 0.0
    %563 = vmatpush1.msra.mxu0 0.0
    %564 = vmatprep.subr.mxu0 0.0
    %565 = vmatpush1.msra.mxu0 0.0
    %566 = vmatprep.subr.mxu0 0.0
    %567 = vmatpush1.msra.mxu0 0.0
    %568 = vmatprep.subr.mxu0 0.0
    %569 = vmatpush1.msra.mxu0 0.0
    %570 = vmatprep.subr.mxu0 0.0
    %571 = vmatpush1.msra.mxu0 0.0
    %572 = vmatprep.subr.mxu0 0.0
    %573 = vmatpush1.msra.mxu0 0.0
    %574 = vmatprep.subr.mxu0 0.0
    %575 = vmatpush1.msra.mxu0 0.0
    %576 = vmatprep.subr.mxu0 0.0
    %577 = vmatpush1.msra.mxu0 0.0
    %578 = vmatprep.subr.mxu0 0.0
    %579 = vmatpush1.msra.mxu0 0.0
    %580 = vmatprep.subr.mxu0 0.0
    %581 = vmatpush1.msra.mxu0 0.0
    %582 = vmatprep.subr.mxu0 0.0
    %583 = vmatpush1.msra.mxu0 0.0
    %584 = vmatprep.mubr.f32.mxu0 0.0
    %v585 = vand.u32 %v18, 4294901760
    %586 = vmatmul.mubr.f32.gmra.mrb[0].mxu0 %v585
    %v587 = vpop.f32.mrb[0].mxu0
    %v588 = vadd.f32 %v469, %v587
    %v589 = vpop.f32.mrb[0].mxu0
    %590 = vdwg.mxu0
    %591 = vmatprep.subr.mxu0 0.0
    %v592 = vand.u32 %v20, 4294901760
    %593 = vmatpush1.msra.mxu0 %v592
    %594 = vmatprep.subr.mxu0 0.0
    %v595 = vand.u32 %v21, 4294901760
    %596 = vmatpush1.msra.mxu0 %v595
    %597 = vmatprep.subr.mxu0 0.0
    %v598 = vand.u32 %v22, 4294901760
    %599 = vmatpush1.msra.mxu0 %v598
    %600 = vmatprep.subr.mxu0 0.0
    %v601 = vand.u32 %v23, 4294901760
    %602 = vmatpush1.msra.mxu0 %v601
    %603 = vmatprep.subr.mxu0 0.0
    %v604 = vand.u32 %v24, 4294901760
    %605 = vmatpush1.msra.mxu0 %v604
    %606 = vmatprep.subr.mxu0 0.0
    %v607 = vand.u32 %v25, 4294901760
    %608 = vmatpush1.msra.mxu0 %v607
    %609 = vmatprep.subr.mxu0 0.0
    %v610 = vand.u32 %v26, 4294901760
    %611 = vmatpush1.msra.mxu0 %v610
    %612 = vmatprep.subr.mxu0 0.0
    %v613 = vand.u32 %v27, 4294901760
    %614 = vmatpush1.msra.mxu0 %v613
    %615 = vmatprep.subr.mxu0 0.0
    %v616 = vand.u32 %v28, 4294901760
    %617 = vmatpush1.msra.mxu0 %v616
    %618 = vmatprep.subr.mxu0 0.0
    %v619 = vand.u32 %v29, 4294901760
    %620 = vmatpush1.msra.mxu0 %v619
    %621 = vmatprep.subr.mxu0 0.0
    %v622 = vand.u32 %v30, 4294901760
    %623 = vmatpush1.msra.mxu0 %v622
    %624 = vmatprep.subr.mxu0 0.0
    %v625 = vand.u32 %v31, 4294901760
    %626 = vmatpush1.msra.mxu0 %v625
    %627 = vmatprep.subr.mxu0 0.0
    %v628 = vand.u32 %v32, 4294901760
    %629 = vmatpush1.msra.mxu0 %v628
    %630 = vmatprep.subr.mxu0 0.0
    %v631 = vand.u32 %v33, 4294901760
    %632 = vmatpush1.msra.mxu0 %v631
    %633 = vmatprep.subr.mxu0 0.0
    %v634 = vand.u32 %v34, 4294901760
    %635 = vmatpush1.msra.mxu0 %v634
    %636 = vmatprep.subr.mxu0 0.0
    %v637 = vand.u32 %v35, 4294901760
    %638 = vmatpush1.msra.mxu0 %v637
    %639 = vmatprep.subr.mxu0 0.0
    %640 = vmatpush1.msra.mxu0 0.0
    %641 = vmatprep.subr.mxu0 0.0
    %642 = vmatpush1.msra.mxu0 0.0
    %643 = vmatprep.subr.mxu0 0.0
    %644 = vmatpush1.msra.mxu0 0.0
    %645 = vmatprep.subr.mxu0 0.0
    %646 = vmatpush1.msra.mxu0 0.0
    %647 = vmatprep.subr.mxu0 0.0
    %648 = vmatpush1.msra.mxu0 0.0
    %649 = vmatprep.subr.mxu0 0.0
    %650 = vmatpush1.msra.mxu0 0.0
    %651 = vmatprep.subr.mxu0 0.0
    %652 = vmatpush1.msra.mxu0 0.0
    %653 = vmatprep.subr.mxu0 0.0
    %654 = vmatpush1.msra.mxu0 0.0
    %655 = vmatprep.subr.mxu0 0.0
    %656 = vmatpush1.msra.mxu0 0.0
    %657 = vmatprep.subr.mxu0 0.0
    %658 = vmatpush1.msra.mxu0 0.0
    %659 = vmatprep.subr.mxu0 0.0
    %660 = vmatpush1.msra.mxu0 0.0
    %661 = vmatprep.subr.mxu0 0.0
    %662 = vmatpush1.msra.mxu0 0.0
    %663 = vmatprep.subr.mxu0 0.0
    %664 = vmatpush1.msra.mxu0 0.0
    %665 = vmatprep.subr.mxu0 0.0
    %666 = vmatpush1.msra.mxu0 0.0
    %667 = vmatprep.subr.mxu0 0.0
    %668 = vmatpush1.msra.mxu0 0.0
    %669 = vmatprep.subr.mxu0 0.0
    %670 = vmatpush1.msra.mxu0 0.0
    %671 = vmatprep.mubr.f32.mxu0 0.0
    %v672 = vand.u32 %v18, 4294901760
    %673 = vmatmul.mubr.f32.gmra.mrb[0].mxu0 %v672
    %v674 = vpop.f32.mrb[0].mxu0
    %v675 = vadd.f32 %v588, %v674
    %v676 = vpop.f32.mrb[0].mxu0
    %677 = vdwg.mxu0
    %v678 = vmul.f32 %v675, 0.03125
    %vm679 = vcmask 64512
    %v681 = vsel %vm679, %v678, 0
    %683 = vmatprep.subr.mxu0 0.0
    %v684 = vand.u32 %v36, 4294901760
    %685 = vmatpush1.msra.mxu0 %v684
    %686 = vmatprep.subr.mxu0 0.0
    %687 = vmatpush1.msra.mxu0 0.0
    %688 = vmatprep.subr.mxu0 0.0
    %689 = vmatpush1.msra.mxu0 0.0
    %690 = vmatprep.subr.mxu0 0.0
    %691 = vmatpush1.msra.mxu0 0.0
    %692 = vmatprep.subr.mxu0 0.0
    %693 = vmatpush1.msra.mxu0 0.0
    %694 = vmatprep.subr.mxu0 0.0
    %695 = vmatpush1.msra.mxu0 0.0
    %696 = vmatprep.subr.mxu0 0.0
    %697 = vmatpush1.msra.mxu0 0.0
    %698 = vmatprep.subr.mxu0 0.0
    %699 = vmatpush1.msra.mxu0 0.0
    %700 = vmatprep.subr.mxu0 0.0
    %701 = vmatpush1.msra.mxu0 0.0
    %702 = vmatprep.subr.mxu0 0.0
    %703 = vmatpush1.msra.mxu0 0.0
    %704 = vmatprep.subr.mxu0 0.0
    %705 = vmatpush1.msra.mxu0 0.0
    %706 = vmatprep.subr.mxu0 0.0
    %707 = vmatpush1.msra.mxu0 0.0
    %708 = vmatprep.subr.mxu0 0.0
    %709 = vmatpush1.msra.mxu0 0.0
    %710 = vmatprep.subr.mxu0 0.0
    %711 = vmatpush1.msra.mxu0 0.0
    %712 = vmatprep.subr.mxu0 0.0
    %713 = vmatpush1.msra.mxu0 0.0
    %714 = vmatprep.subr.mxu0 0.0
    %715 = vmatpush1.msra.mxu0 0.0
    %716 = vmatprep.subr.mxu0 0.0
    %717 = vmatpush1.msra.mxu0 0.0
    %718 = vmatprep.subr.mxu0 0.0
    %719 = vmatpush1.msra.mxu0 0.0
    %720 = vmatprep.subr.mxu0 0.0
    %721 = vmatpush1.msra.mxu0 0.0
    %722 = vmatprep.subr.mxu0 0.0
    %723 = vmatpush1.msra.mxu0 0.0
    %724 = vmatprep.subr.mxu0 0.0
    %725 = vmatpush1.msra.mxu0 0.0
    %726 = vmatprep.subr.mxu0 0.0
    %727 = vmatpush1.msra.mxu0 0.0
    %728 = vmatprep.subr.mxu0 0.0
    %729 = vmatpush1.msra.mxu0 0.0
    %730 = vmatprep.subr.mxu0 0.0
    %731 = vmatpush1.msra.mxu0 0.0
    %732 = vmatprep.subr.mxu0 0.0
    %733 = vmatpush1.msra.mxu0 0.0
    %734 = vmatprep.subr.mxu0 0.0
    %735 = vmatpush1.msra.mxu0 0.0
    %736 = vmatprep.subr.mxu0 0.0
    %737 = vmatpush1.msra.mxu0 0.0
    %738 = vmatprep.subr.mxu0 0.0
    %739 = vmatpush1.msra.mxu0 0.0
    %740 = vmatprep.subr.mxu0 0.0
    %741 = vmatpush1.msra.mxu0 0.0
    %742 = vmatprep.subr.mxu0 0.0
    %743 = vmatpush1.msra.mxu0 0.0
    %744 = vmatprep.subr.mxu0 0.0
    %745 = vmatpush1.msra.mxu0 0.0
    %746 = vmatprep.subr.mxu0 0.0
    %747 = vmatpush1.msra.mxu0 0.0
    %748 = vmatprep.mubr.f32.mxu0 0.0
    %v749 = vand.u32 %v681, 4294901760
    %v750 = vsub.f32 %v681, %v749
    %v751 = vand.u32 %v750, 4294901760
    %v752 = vsub.f32 %v750, %v751
    %v753 = vand.u32 %v752, 4294901760
    %754 = vmatmul.mubr.f32.gmra.mrb[0].mxu0 %v753
    %v755 = vpop.f32.mrb[0].mxu0
    %v756 = vadd.f32 0.0, %v755
    %v757 = vpop.f32.mrb[0].mxu0
    %758 = vdwg.mxu0
    %759 = vmatprep.subr.mxu0 0.0
    %v760 = vand.u32 %v36, 4294901760
    %v761 = vsub.f32 %v36, %v760
    %v762 = vand.u32 %v761, 4294901760
    %v763 = vsub.f32 %v761, %v762
    %v764 = vand.u32 %v763, 4294901760
    %765 = vmatpush1.msra.mxu0 %v764
    %766 = vmatprep.subr.mxu0 0.0
    %767 = vmatpush1.msra.mxu0 0.0
    %768 = vmatprep.subr.mxu0 0.0
    %769 = vmatpush1.msra.mxu0 0.0
    %770 = vmatprep.subr.mxu0 0.0
    %771 = vmatpush1.msra.mxu0 0.0
    %772 = vmatprep.subr.mxu0 0.0
    %773 = vmatpush1.msra.mxu0 0.0
    %774 = vmatprep.subr.mxu0 0.0
    %775 = vmatpush1.msra.mxu0 0.0
    %776 = vmatprep.subr.mxu0 0.0
    %777 = vmatpush1.msra.mxu0 0.0
    %778 = vmatprep.subr.mxu0 0.0
    %779 = vmatpush1.msra.mxu0 0.0
    %780 = vmatprep.subr.mxu0 0.0
    %781 = vmatpush1.msra.mxu0 0.0
    %782 = vmatprep.subr.mxu0 0.0
    %783 = vmatpush1.msra.mxu0 0.0
    %784 = vmatprep.subr.mxu0 0.0
    %785 = vmatpush1.msra.mxu0 0.0
    %786 = vmatprep.subr.mxu0 0.0
    %787 = vmatpush1.msra.mxu0 0.0
    %788 = vmatprep.subr.mxu0 0.0
    %789 = vmatpush1.msra.mxu0 0.0
    %790 = vmatprep.subr.mxu0 0.0
    %791 = vmatpush1.msra.mxu0 0.0
    %792 = vmatprep.subr.mxu0 0.0
    %793 = vmatpush1.msra.mxu0 0.0
    %794 = vmatprep.subr.mxu0 0.0
    %795 = vmatpush1.msra.mxu0 0.0
    %796 = vmatprep.subr.mxu0 0.0
    %797 = vmatpush1.msra.mxu0 0.0
    %798 = vmatprep.subr.mxu0 0.0
    %799 = vmatpush1.msra.mxu0 0.0
    %800 = vmatprep.subr.mxu0 0.0
    %801 = vmatpush1.msra.mxu0 0.0
    %802 = vmatprep.subr.mxu0 0.0
    %803 = vmatpush1.msra.mxu0 0.0
    %804 = vmatprep.subr.mxu0 0.0
    %805 = vmatpush1.msra.mxu0 0.0
    %806 = vmatprep.subr.mxu0 0.0
    %807 = vmatpush1.msra.mxu0 0.0
    %808 = vmatprep.subr.mxu0 0.0
    %809 = vmatpush1.msra.mxu0 0.0
    %810 = vmatprep.subr.mxu0 0.0
    %811 = vmatpush1.msra.mxu0 0.0
    %812 = vmatprep.subr.mxu0 0.0
    %813 = vmatpush1.msra.mxu0 0.0
    %814 = vmatprep.subr.mxu0 0.0
    %815 = vmatpush1.msra.mxu0 0.0
    %816 = vmatprep.subr.mxu0 0.0
    %817 = vmatpush1.msra.mxu0 0.0
    %818 = vmatprep.subr.mxu0 0.0
    %819 = vmatpush1.msra.mxu0 0.0
    %820 = vmatprep.subr.mxu0 0.0
    %821 = vmatpush1.msra.mxu0 0.0
    %822 = vmatprep.subr.mxu0 0.0
    %823 = vmatpush1.msra.mxu0 0.0
    %824 = vmatprep.subr.mxu0 0.0
    %825 = vmatpush1.msra.mxu0 0.0
    %826 = vmatprep.subr.mxu0 0.0
    %827 = vmatpush1.msra.mxu0 0.0
    %828 = vmatprep.mubr.f32.mxu0 0.0
    %v829 = vand.u32 %v681, 4294901760
    %830 = vmatmul.mubr.f32.gmra.mrb[0].mxu0 %v829
    %v831 = vpop.f32.mrb[0].mxu0
    %v832 = vadd.f32 %v756, %v831
    %v833 = vpop.f32.mrb[0].mxu0
    %834 = vdwg.mxu0
    %835 = vmatprep.subr.mxu0 0.0
    %v836 = vand.u32 %v36, 4294901760
    %v837 = vsub.f32 %v36, %v836
    %838 = vmatpush1.msra.mxu0 %v837
    %839 = vmatprep.subr.mxu0 0.0
    %840 = vmatpush1.msra.mxu0 0.0
    %841 = vmatprep.subr.mxu0 0.0
    %842 = vmatpush1.msra.mxu0 0.0
    %843 = vmatprep.subr.mxu0 0.0
    %844 = vmatpush1.msra.mxu0 0.0
    %845 = vmatprep.subr.mxu0 0.0
    %846 = vmatpush1.msra.mxu0 0.0
    %847 = vmatprep.subr.mxu0 0.0
    %848 = vmatpush1.msra.mxu0 0.0
    %849 = vmatprep.subr.mxu0 0.0
    %850 = vmatpush1.msra.mxu0 0.0
    %851 = vmatprep.subr.mxu0 0.0
    %852 = vmatpush1.msra.mxu0 0.0
    %853 = vmatprep.subr.mxu0 0.0
    %854 = vmatpush1.msra.mxu0 0.0
    %855 = vmatprep.subr.mxu0 0.0
    %856 = vmatpush1.msra.mxu0 0.0
    %857 = vmatprep.subr.mxu0 0.0
    %858 = vmatpush1.msra.mxu0 0.0
    %859 = vmatprep.subr.mxu0 0.0
    %860 = vmatpush1.msra.mxu0 0.0
    %861 = vmatprep.subr.mxu0 0.0
    %862 = vmatpush1.msra.mxu0 0.0
    %863 = vmatprep.subr.mxu0 0.0
    %864 = vmatpush1.msra.mxu0 0.0
    %865 = vmatprep.subr.mxu0 0.0
    %866 = vmatpush1.msra.mxu0 0.0
    %867 = vmatprep.subr.mxu0 0.0
    %868 = vmatpush1.msra.mxu0 0.0
    %869 = vmatprep.subr.mxu0 0.0
    %870 = vmatpush1.msra.mxu0 0.0
    %871 = vmatprep.subr.mxu0 0.0
    %872 = vmatpush1.msra.mxu0 0.0
    %873 = vmatprep.subr.mxu0 0.0
    %874 = vmatpush1.msra.mxu0 0.0
    %875 = vmatprep.subr.mxu0 0.0
    %876 = vmatpush1.msra.mxu0 0.0
    %877 = vmatprep.subr.mxu0 0.0
    %878 = vmatpush1.msra.mxu0 0.0
    %879 = vmatprep.subr.mxu0 0.0
    %880 = vmatpush1.msra.mxu0 0.0
    %881 = vmatprep.subr.mxu0 0.0
    %882 = vmatpush1.msra.mxu0 0.0
    %883 = vmatprep.subr.mxu0 0.0
    %884 = vmatpush1.msra.mxu0 0.0
    %885 = vmatprep.subr.mxu0 0.0
    %886 = vmatpush1.msra.mxu0 0.0
    %887 = vmatprep.subr.mxu0 0.0
    %888 = vmatpush1.msra.mxu0 0.0
    %889 = vmatprep.subr.mxu0 0.0
    %890 = vmatpush1.msra.mxu0 0.0
    %891 = vmatprep.subr.mxu0 0.0
    %892 = vmatpush1.msra.mxu0 0.0
    %893 = vmatprep.subr.mxu0 0.0
    %894 = vmatpush1.msra.mxu0 0.0
    %895 = vmatprep.subr.mxu0 0.0
    %896 = vmatpush1.msra.mxu0 0.0
    %897 = vmatprep.subr.mxu0 0.0
    %898 = vmatpush1.msra.mxu0 0.0
    %899 = vmatprep.subr.mxu0 0.0
    %900 = vmatpush1.msra.mxu0 0.0
    %901 = vmatprep.mubr.f32.mxu0 0.0
    %v902 = vand.u32 %v681, 4294901760
    %v903 = vsub.f32 %v681, %v902
    %904 = vmatmul.mubr.f32.gmra.mrb[0].mxu0 %v903
    %v905 = vpop.f32.mrb[0].mxu0
    %v906 = vadd.f32 %v832, %v905
    %v907 = vpop.f32.mrb[0].mxu0
    %908 = vdwg.mxu0
    %909 = vmatprep.subr.mxu0 0.0
    %v910 = vand.u32 %v36, 4294901760
    %911 = vmatpush1.msra.mxu0 %v910
    %912 = vmatprep.subr.mxu0 0.0
    %913 = vmatpush1.msra.mxu0 0.0
    %914 = vmatprep.subr.mxu0 0.0
    %915 = vmatpush1.msra.mxu0 0.0
    %916 = vmatprep.subr.mxu0 0.0
    %917 = vmatpush1.msra.mxu0 0.0
    %918 = vmatprep.subr.mxu0 0.0
    %919 = vmatpush1.msra.mxu0 0.0
    %920 = vmatprep.subr.mxu0 0.0
    %921 = vmatpush1.msra.mxu0 0.0
    %922 = vmatprep.subr.mxu0 0.0
    %923 = vmatpush1.msra.mxu0 0.0
    %924 = vmatprep.subr.mxu0 0.0
    %925 = vmatpush1.msra.mxu0 0.0
    %926 = vmatprep.subr.mxu0 0.0
    %927 = vmatpush1.msra.mxu0 0.0
    %928 = vmatprep.subr.mxu0 0.0
    %929 = vmatpush1.msra.mxu0 0.0
    %930 = vmatprep.subr.mxu0 0.0
    %931 = vmatpush1.msra.mxu0 0.0
    %932 = vmatprep.subr.mxu0 0.0
    %933 = vmatpush1.msra.mxu0 0.0
    %934 = vmatprep.subr.mxu0 0.0
    %935 = vmatpush1.msra.mxu0 0.0
    %936 = vmatprep.subr.mxu0 0.0
    %937 = vmatpush1.msra.mxu0 0.0
    %938 = vmatprep.subr.mxu0 0.0
    %939 = vmatpush1.msra.mxu0 0.0
    %940 = vmatprep.subr.mxu0 0.0
    %941 = vmatpush1.msra.mxu0 0.0
    %942 = vmatprep.subr.mxu0 0.0
    %943 = vmatpush1.msra.mxu0 0.0
    %944 = vmatprep.subr.mxu0 0.0
    %945 = vmatpush1.msra.mxu0 0.0
    %946 = vmatprep.subr.mxu0 0.0
    %947 = vmatpush1.msra.mxu0 0.0
    %948 = vmatprep.subr.mxu0 0.0
    %949 = vmatpush1.msra.mxu0 0.0
    %950 = vmatprep.subr.mxu0 0.0
    %951 = vmatpush1.msra.mxu0 0.0
    %952 = vmatprep.subr.mxu0 0.0
    %953 = vmatpush1.msra.mxu0 0.0
    %954 = vmatprep.subr.mxu0 0.0
    %955 = vmatpush1.msra.mxu0 0.0
    %956 = vmatprep.subr.mxu0 0.0
    %957 = vmatpush1.msra.mxu0 0.0
    %958 = vmatprep.subr.mxu0 0.0
    %959 = vmatpush1.msra.mxu0 0.0
    %960 = vmatprep.subr.mxu0 0.0
    %961 = vmatpush1.msra.mxu0 0.0
    %962 = vmatprep.subr.mxu0 0.0
    %963 = vmatpush1.msra.mxu0 0.0
    %964 = vmatprep.subr.mxu0 0.0
    %965 = vmatpush1.msra.mxu0 0.0
    %966 = vmatprep.subr.mxu0 0.0
    %967 = vmatpush1.msra.mxu0 0.0
    %968 = vmatprep.subr.mxu0 0.0
    %969 = vmatpush1.msra.mxu0 0.0
    %970 = vmatprep.subr.mxu0 0.0
    %971 = vmatpush1.msra.mxu0 0.0
    %972 = vmatprep.subr.mxu0 0.0
    %973 = vmatpush1.msra.mxu0 0.0
    %974 = vmatprep.mubr.f32.mxu0 0.0
    %v975 = vand.u32 %v681, 4294901760
    %v976 = vsub.f32 %v681, %v975
    %v977 = vand.u32 %v976, 4294901760
    %978 = vmatmul.mubr.f32.gmra.mrb[0].mxu0 %v977
    %v979 = vpop.f32.mrb[0].mxu0
    %v980 = vadd.f32 %v906, %v979
    %v981 = vpop.f32.mrb[0].mxu0
    %982 = vdwg.mxu0
    %983 = vmatprep.subr.mxu0 0.0
    %v984 = vand.u32 %v36, 4294901760
    %v985 = vsub.f32 %v36, %v984
    %v986 = vand.u32 %v985, 4294901760
    %987 = vmatpush1.msra.mxu0 %v986
    %988 = vmatprep.subr.mxu0 0.0
    %989 = vmatpush1.msra.mxu0 0.0
    %990 = vmatprep.subr.mxu0 0.0
    %991 = vmatpush1.msra.mxu0 0.0
    %992 = vmatprep.subr.mxu0 0.0
    %993 = vmatpush1.msra.mxu0 0.0
    %994 = vmatprep.subr.mxu0 0.0
    %995 = vmatpush1.msra.mxu0 0.0
    %996 = vmatprep.subr.mxu0 0.0
    %997 = vmatpush1.msra.mxu0 0.0
    %998 = vmatprep.subr.mxu0 0.0
    %999 = vmatpush1.msra.mxu0 0.0
    %1000 = vmatprep.subr.mxu0 0.0
    %1001 = vmatpush1.msra.mxu0 0.0
    %1002 = vmatprep.subr.mxu0 0.0
    %1003 = vmatpush1.msra.mxu0 0.0
    %1004 = vmatprep.subr.mxu0 0.0
    %1005 = vmatpush1.msra.mxu0 0.0
    %1006 = vmatprep.subr.mxu0 0.0
    %1007 = vmatpush1.msra.mxu0 0.0
    %1008 = vmatprep.subr.mxu0 0.0
    %1009 = vmatpush1.msra.mxu0 0.0
    %1010 = vmatprep.subr.mxu0 0.0
    %1011 = vmatpush1.msra.mxu0 0.0
    %1012 = vmatprep.subr.mxu0 0.0
    %1013 = vmatpush1.msra.mxu0 0.0
    %1014 = vmatprep.subr.mxu0 0.0
    %1015 = vmatpush1.msra.mxu0 0.0
    %1016 = vmatprep.subr.mxu0 0.0
    %1017 = vmatpush1.msra.mxu0 0.0
    %1018 = vmatprep.subr.mxu0 0.0
    %1019 = vmatpush1.msra.mxu0 0.0
    %1020 = vmatprep.subr.mxu0 0.0
    %1021 = vmatpush1.msra.mxu0 0.0
    %1022 = vmatprep.subr.mxu0 0.0
    %1023 = vmatpush1.msra.mxu0 0.0
    %1024 = vmatprep.subr.mxu0 0.0
    %1025 = vmatpush1.msra.mxu0 0.0
    %1026 = vmatprep.subr.mxu0 0.0
    %1027 = vmatpush1.msra.mxu0 0.0
    %1028 = vmatprep.subr.mxu0 0.0
    %1029 = vmatpush1.msra.mxu0 0.0
    %1030 = vmatprep.subr.mxu0 0.0
    %1031 = vmatpush1.msra.mxu0 0.0
    %1032 = vmatprep.subr.mxu0 0.0
    %1033 = vmatpush1.msra.mxu0 0.0
    %1034 = vmatprep.subr.mxu0 0.0
    %1035 = vmatpush1.msra.mxu0 0.0
    %1036 = vmatprep.subr.mxu0 0.0
    %1037 = vmatpush1.msra.mxu0 0.0
    %1038 = vmatprep.subr.mxu0 0.0
    %1039 = vmatpush1.msra.mxu0 0.0
    %1040 = vmatprep.subr.mxu0 0.0
    %1041 = vmatpush1.msra.mxu0 0.0
    %1042 = vmatprep.subr.mxu0 0.0
    %1043 = vmatpush1.msra.mxu0 0.0
    %1044 = vmatprep.subr.mxu0 0.0
    %1045 = vmatpush1.msra.mxu0 0.0
    %1046 = vmatprep.subr.mxu0 0.0
    %1047 = vmatpush1.msra.mxu0 0.0
    %1048 = vmatprep.subr.mxu0 0.0
    %1049 = vmatpush1.msra.mxu0 0.0
    %1050 = vmatprep.mubr.f32.mxu0 0.0
    %v1051 = vand.u32 %v681, 4294901760
    %1052 = vmatmul.mubr.f32.gmra.mrb[0].mxu0 %v1051
    %v1053 = vpop.f32.mrb[0].mxu0
    %v1054 = vadd.f32 %v980, %v1053
    %v1055 = vpop.f32.mrb[0].mxu0
    %1056 = vdwg.mxu0
    %1057 = vmatprep.subr.mxu0 0.0
    %v1058 = vand.u32 %v36, 4294901760
    %1059 = vmatpush1.msra.mxu0 %v1058
    %1060 = vmatprep.subr.mxu0 0.0
    %1061 = vmatpush1.msra.mxu0 0.0
    %1062 = vmatprep.subr.mxu0 0.0
    %1063 = vmatpush1.msra.mxu0 0.0
    %1064 = vmatprep.subr.mxu0 0.0
    %1065 = vmatpush1.msra.mxu0 0.0
    %1066 = vmatprep.subr.mxu0 0.0
    %1067 = vmatpush1.msra.mxu0 0.0
    %1068 = vmatprep.subr.mxu0 0.0
    %1069 = vmatpush1.msra.mxu0 0.0
    %1070 = vmatprep.subr.mxu0 0.0
    %1071 = vmatpush1.msra.mxu0 0.0
    %1072 = vmatprep.subr.mxu0 0.0
    %1073 = vmatpush1.msra.mxu0 0.0
    %1074 = vmatprep.subr.mxu0 0.0
    %1075 = vmatpush1.msra.mxu0 0.0
    %1076 = vmatprep.subr.mxu0 0.0
    %1077 = vmatpush1.msra.mxu0 0.0
    %1078 = vmatprep.subr.mxu0 0.0
    %1079 = vmatpush1.msra.mxu0 0.0
    %1080 = vmatprep.subr.mxu0 0.0
    %1081 = vmatpush1.msra.mxu0 0.0
    %1082 = vmatprep.subr.mxu0 0.0
    %1083 = vmatpush1.msra.mxu0 0.0
    %1084 = vmatprep.subr.mxu0 0.0
    %1085 = vmatpush1.msra.mxu0 0.0
    %1086 = vmatprep.subr.mxu0 0.0
    %1087 = vmatpush1.msra.mxu0 0.0
    %1088 = vmatprep.subr.mxu0 0.0
    %1089 = vmatpush1.msra.mxu0 0.0
    %1090 = vmatprep.subr.mxu0 0.0
    %1091 = vmatpush1.msra.mxu0 0.0
    %1092 = vmatprep.subr.mxu0 0.0
    %1093 = vmatpush1.msra.mxu0 0.0
    %1094 = vmatprep.subr.mxu0 0.0
    %1095 = vmatpush1.msra.mxu0 0.0
    %1096 = vmatprep.subr.mxu0 0.0
    %1097 = vmatpush1.msra.mxu0 0.0
    %1098 = vmatprep.subr.mxu0 0.0
    %1099 = vmatpush1.msra.mxu0 0.0
    %1100 = vmatprep.subr.mxu0 0.0
    %1101 = vmatpush1.msra.mxu0 0.0
    %1102 = vmatprep.subr.mxu0 0.0
    %1103 = vmatpush1.msra.mxu0 0.0
    %1104 = vmatprep.subr.mxu0 0.0
    %1105 = vmatpush1.msra.mxu0 0.0
    %1106 = vmatprep.subr.mxu0 0.0
    %1107 = vmatpush1.msra.mxu0 0.0
    %1108 = vmatprep.subr.mxu0 0.0
    %1109 = vmatpush1.msra.mxu0 0.0
    %1110 = vmatprep.subr.mxu0 0.0
    %1111 = vmatpush1.msra.mxu0 0.0
    %1112 = vmatprep.subr.mxu0 0.0
    %1113 = vmatpush1.msra.mxu0 0.0
    %1114 = vmatprep.subr.mxu0 0.0
    %1115 = vmatpush1.msra.mxu0 0.0
    %1116 = vmatprep.subr.mxu0 0.0
    %1117 = vmatpush1.msra.mxu0 0.0
    %1118 = vmatprep.subr.mxu0 0.0
    %1119 = vmatpush1.msra.mxu0 0.0
    %1120 = vmatprep.subr.mxu0 0.0
    %1121 = vmatpush1.msra.mxu0 0.0
    %1122 = vmatprep.mubr.f32.mxu0 0.0
    %v1123 = vand.u32 %v681, 4294901760
    %1124 = vmatmul.mubr.f32.gmra.mrb[0].mxu0 %v1123
    %v1125 = vpop.f32.mrb[0].mxu0
    %v1126 = vadd.f32 %v1054, %v1125
    %v1127 = vpop.f32.mrb[0].mxu0
    %1128 = vdwg.mxu0
    %v1129 = vsub.f32 %v18, %v1126
    %v1130 = vmul.f32 %v1129, %v1129
    %1131 = vmatprep.subr.mxu0 0.0
    %v1132 = vand.u32 %v20, 4294901760
    %1133 = vmatpush1.msra.mxu0 %v1132
    %1134 = vmatprep.subr.mxu0 0.0
    %v1135 = vand.u32 %v21, 4294901760
    %1136 = vmatpush1.msra.mxu0 %v1135
    %1137 = vmatprep.subr.mxu0 0.0
    %v1138 = vand.u32 %v22, 4294901760
    %1139 = vmatpush1.msra.mxu0 %v1138
    %1140 = vmatprep.subr.mxu0 0.0
    %v1141 = vand.u32 %v23, 4294901760
    %1142 = vmatpush1.msra.mxu0 %v1141
    %1143 = vmatprep.subr.mxu0 0.0
    %v1144 = vand.u32 %v24, 4294901760
    %1145 = vmatpush1.msra.mxu0 %v1144
    %1146 = vmatprep.subr.mxu0 0.0
    %v1147 = vand.u32 %v25, 4294901760
    %1148 = vmatpush1.msra.mxu0 %v1147
    %1149 = vmatprep.subr.mxu0 0.0
    %v1150 = vand.u32 %v26, 4294901760
    %1151 = vmatpush1.msra.mxu0 %v1150
    %1152 = vmatprep.subr.mxu0 0.0
    %v1153 = vand.u32 %v27, 4294901760
    %1154 = vmatpush1.msra.mxu0 %v1153
    %1155 = vmatprep.subr.mxu0 0.0
    %v1156 = vand.u32 %v28, 4294901760
    %1157 = vmatpush1.msra.mxu0 %v1156
    %1158 = vmatprep.subr.mxu0 0.0
    %v1159 = vand.u32 %v29, 4294901760
    %1160 = vmatpush1.msra.mxu0 %v1159
    %1161 = vmatprep.subr.mxu0 0.0
    %v1162 = vand.u32 %v30, 4294901760
    %1163 = vmatpush1.msra.mxu0 %v1162
    %1164 = vmatprep.subr.mxu0 0.0
    %v1165 = vand.u32 %v31, 4294901760
    %1166 = vmatpush1.msra.mxu0 %v1165
    %1167 = vmatprep.subr.mxu0 0.0
    %v1168 = vand.u32 %v32, 4294901760
    %1169 = vmatpush1.msra.mxu0 %v1168
    %1170 = vmatprep.subr.mxu0 0.0
    %v1171 = vand.u32 %v33, 4294901760
    %1172 = vmatpush1.msra.mxu0 %v1171
    %1173 = vmatprep.subr.mxu0 0.0
    %v1174 = vand.u32 %v34, 4294901760
    %1175 = vmatpush1.msra.mxu0 %v1174
    %1176 = vmatprep.subr.mxu0 0.0
    %v1177 = vand.u32 %v35, 4294901760
    %1178 = vmatpush1.msra.mxu0 %v1177
    %1179 = vmatprep.subr.mxu0 0.0
    %1180 = vmatpush1.msra.mxu0 0.0
    %1181 = vmatprep.subr.mxu0 0.0
    %1182 = vmatpush1.msra.mxu0 0.0
    %1183 = vmatprep.subr.mxu0 0.0
    %1184 = vmatpush1.msra.mxu0 0.0
    %1185 = vmatprep.subr.mxu0 0.0
    %1186 = vmatpush1.msra.mxu0 0.0
    %1187 = vmatprep.subr.mxu0 0.0
    %1188 = vmatpush1.msra.mxu0 0.0
    %1189 = vmatprep.subr.mxu0 0.0
    %1190 = vmatpush1.msra.mxu0 0.0
    %1191 = vmatprep.subr.mxu0 0.0
    %1192 = vmatpush1.msra.mxu0 0.0
    %1193 = vmatprep.subr.mxu0 0.0
    %1194 = vmatpush1.msra.mxu0 0.0
    %1195 = vmatprep.subr.mxu0 0.0
    %1196 = vmatpush1.msra.mxu0 0.0
    %1197 = vmatprep.subr.mxu0 0.0
    %1198 = vmatpush1.msra.mxu0 0.0
    %1199 = vmatprep.subr.mxu0 0.0
    %1200 = vmatpush1.msra.mxu0 0.0
    %1201 = vmatprep.subr.mxu0 0.0
    %1202 = vmatpush1.msra.mxu0 0.0
    %1203 = vmatprep.subr.mxu0 0.0
    %1204 = vmatpush1.msra.mxu0 0.0
    %1205 = vmatprep.subr.mxu0 0.0
    %1206 = vmatpush1.msra.mxu0 0.0
    %1207 = vmatprep.subr.mxu0 0.0
    %1208 = vmatpush1.msra.mxu0 0.0
    %1209 = vmatprep.subr.mxu0 0.0
    %1210 = vmatpush1.msra.mxu0 0.0
    %1211 = vmatprep.mubr.f32.mxu0 0.0
    %v1212 = vand.u32 %v1130, 4294901760
    %v1213 = vsub.f32 %v1130, %v1212
    %v1214 = vand.u32 %v1213, 4294901760
    %v1215 = vsub.f32 %v1213, %v1214
    %v1216 = vand.u32 %v1215, 4294901760
    %1217 = vmatmul.mubr.f32.gmra.mrb[0].mxu0 %v1216
    %v1218 = vpop.f32.mrb[0].mxu0
    %v1219 = vadd.f32 0.0, %v1218
    %v1220 = vpop.f32.mrb[0].mxu0
    %1221 = vdwg.mxu0
    %1222 = vmatprep.subr.mxu0 0.0
    %v1223 = vand.u32 %v20, 4294901760
    %v1224 = vsub.f32 %v20, %v1223
    %v1225 = vand.u32 %v1224, 4294901760
    %v1226 = vsub.f32 %v1224, %v1225
    %v1227 = vand.u32 %v1226, 4294901760
    %1228 = vmatpush1.msra.mxu0 %v1227
    %1229 = vmatprep.subr.mxu0 0.0
    %v1230 = vand.u32 %v21, 4294901760
    %v1231 = vsub.f32 %v21, %v1230
    %v1232 = vand.u32 %v1231, 4294901760
    %v1233 = vsub.f32 %v1231, %v1232
    %v1234 = vand.u32 %v1233, 4294901760
    %1235 = vmatpush1.msra.mxu0 %v1234
    %1236 = vmatprep.subr.mxu0 0.0
    %v1237 = vand.u32 %v22, 4294901760
    %v1238 = vsub.f32 %v22, %v1237
    %v1239 = vand.u32 %v1238, 4294901760
    %v1240 = vsub.f32 %v1238, %v1239
    %v1241 = vand.u32 %v1240, 4294901760
    %1242 = vmatpush1.msra.mxu0 %v1241
    %1243 = vmatprep.subr.mxu0 0.0
    %v1244 = vand.u32 %v23, 4294901760
    %v1245 = vsub.f32 %v23, %v1244
    %v1246 = vand.u32 %v1245, 4294901760
    %v1247 = vsub.f32 %v1245, %v1246
    %v1248 = vand.u32 %v1247, 4294901760
    %1249 = vmatpush1.msra.mxu0 %v1248
    %1250 = vmatprep.subr.mxu0 0.0
    %v1251 = vand.u32 %v24, 4294901760
    %v1252 = vsub.f32 %v24, %v1251
    %v1253 = vand.u32 %v1252, 4294901760
    %v1254 = vsub.f32 %v1252, %v1253
    %v1255 = vand.u32 %v1254, 4294901760
    %1256 = vmatpush1.msra.mxu0 %v1255
    %1257 = vmatprep.subr.mxu0 0.0
    %v1258 = vand.u32 %v25, 4294901760
    %v1259 = vsub.f32 %v25, %v1258
    %v1260 = vand.u32 %v1259, 4294901760
    %v1261 = vsub.f32 %v1259, %v1260
    %v1262 = vand.u32 %v1261, 4294901760
    %1263 = vmatpush1.msra.mxu0 %v1262
    %1264 = vmatprep.subr.mxu0 0.0
    %v1265 = vand.u32 %v26, 4294901760
    %v1266 = vsub.f32 %v26, %v1265
    %v1267 = vand.u32 %v1266, 4294901760
    %v1268 = vsub.f32 %v1266, %v1267
    %v1269 = vand.u32 %v1268, 4294901760
    %1270 = vmatpush1.msra.mxu0 %v1269
    %1271 = vmatprep.subr.mxu0 0.0
    %v1272 = vand.u32 %v27, 4294901760
    %v1273 = vsub.f32 %v27, %v1272
    %v1274 = vand.u32 %v1273, 4294901760
    %v1275 = vsub.f32 %v1273, %v1274
    %v1276 = vand.u32 %v1275, 4294901760
    %1277 = vmatpush1.msra.mxu0 %v1276
    %1278 = vmatprep.subr.mxu0 0.0
    %v1279 = vand.u32 %v28, 4294901760
    %v1280 = vsub.f32 %v28, %v1279
    %v1281 = vand.u32 %v1280, 4294901760
    %v1282 = vsub.f32 %v1280, %v1281
    %v1283 = vand.u32 %v1282, 4294901760
    %1284 = vmatpush1.msra.mxu0 %v1283
    %1285 = vmatprep.subr.mxu0 0.0
    %v1286 = vand.u32 %v29, 4294901760
    %v1287 = vsub.f32 %v29, %v1286
    %v1288 = vand.u32 %v1287, 4294901760
    %v1289 = vsub.f32 %v1287, %v1288
    %v1290 = vand.u32 %v1289, 4294901760
    %1291 = vmatpush1.msra.mxu0 %v1290
    %1292 = vmatprep.subr.mxu0 0.0
    %v1293 = vand.u32 %v30, 4294901760
    %v1294 = vsub.f32 %v30, %v1293
    %v1295 = vand.u32 %v1294, 4294901760
    %v1296 = vsub.f32 %v1294, %v1295
    %v1297 = vand.u32 %v1296, 4294901760
    %1298 = vmatpush1.msra.mxu0 %v1297
    %1299 = vmatprep.subr.mxu0 0.0
    %v1300 = vand.u32 %v31, 4294901760
    %v1301 = vsub.f32 %v31, %v1300
    %v1302 = vand.u32 %v1301, 4294901760
    %v1303 = vsub.f32 %v1301, %v1302
    %v1304 = vand.u32 %v1303, 4294901760
    %1305 = vmatpush1.msra.mxu0 %v1304
    %1306 = vmatprep.subr.mxu0 0.0
    %v1307 = vand.u32 %v32, 4294901760
    %v1308 = vsub.f32 %v32, %v1307
    %v1309 = vand.u32 %v1308, 4294901760
    %v1310 = vsub.f32 %v1308, %v1309
    %v1311 = vand.u32 %v1310, 4294901760
    %1312 = vmatpush1.msra.mxu0 %v1311
    %1313 = vmatprep.subr.mxu0 0.0
    %v1314 = vand.u32 %v33, 4294901760
    %v1315 = vsub.f32 %v33, %v1314
    %v1316 = vand.u32 %v1315, 4294901760
    %v1317 = vsub.f32 %v1315, %v1316
    %v1318 = vand.u32 %v1317, 4294901760
    %1319 = vmatpush1.msra.mxu0 %v1318
    %1320 = vmatprep.subr.mxu0 0.0
    %v1321 = vand.u32 %v34, 4294901760
    %v1322 = vsub.f32 %v34, %v1321
    %v1323 = vand.u32 %v1322, 4294901760
    %v1324 = vsub.f32 %v1322, %v1323
    %v1325 = vand.u32 %v1324, 4294901760
    %1326 = vmatpush1.msra.mxu0 %v1325
    %1327 = vmatprep.subr.mxu0 0.0
    %v1328 = vand.u32 %v35, 4294901760
    %v1329 = vsub.f32 %v35, %v1328
    %v1330 = vand.u32 %v1329, 4294901760
    %v1331 = vsub.f32 %v1329, %v1330
    %v1332 = vand.u32 %v1331, 4294901760
    %1333 = vmatpush1.msra.mxu0 %v1332
    %1334 = vmatprep.subr.mxu0 0.0
    %1335 = vmatpush1.msra.mxu0 0.0
    %1336 = vmatprep.subr.mxu0 0.0
    %1337 = vmatpush1.msra.mxu0 0.0
    %1338 = vmatprep.subr.mxu0 0.0
    %1339 = vmatpush1.msra.mxu0 0.0
    %1340 = vmatprep.subr.mxu0 0.0
    %1341 = vmatpush1.msra.mxu0 0.0
    %1342 = vmatprep.subr.mxu0 0.0
    %1343 = vmatpush1.msra.mxu0 0.0
    %1344 = vmatprep.subr.mxu0 0.0
    %1345 = vmatpush1.msra.mxu0 0.0
    %1346 = vmatprep.subr.mxu0 0.0
    %1347 = vmatpush1.msra.mxu0 0.0
    %1348 = vmatprep.subr.mxu0 0.0
    %1349 = vmatpush1.msra.mxu0 0.0
    %1350 = vmatprep.subr.mxu0 0.0
    %1351 = vmatpush1.msra.mxu0 0.0
    %1352 = vmatprep.subr.mxu0 0.0
    %1353 = vmatpush1.msra.mxu0 0.0
    %1354 = vmatprep.subr.mxu0 0.0
    %1355 = vmatpush1.msra.mxu0 0.0
    %1356 = vmatprep.subr.mxu0 0.0
    %1357 = vmatpush1.msra.mxu0 0.0
    %1358 = vmatprep.subr.mxu0 0.0
    %1359 = vmatpush1.msra.mxu0 0.0
    %1360 = vmatprep.subr.mxu0 0.0
    %1361 = vmatpush1.msra.mxu0 0.0
    %1362 = vmatprep.subr.mxu0 0.0
    %1363 = vmatpush1.msra.mxu0 0.0
    %1364 = vmatprep.subr.mxu0 0.0
    %1365 = vmatpush1.msra.mxu0 0.0
    %1366 = vmatprep.mubr.f32.mxu0 0.0
    %v1367 = vand.u32 %v1130, 4294901760
    %1368 = vmatmul.mubr.f32.gmra.mrb[0].mxu0 %v1367
    %v1369 = vpop.f32.mrb[0].mxu0
    %v1370 = vadd.f32 %v1219, %v1369
    %v1371 = vpop.f32.mrb[0].mxu0
    %1372 = vdwg.mxu0
    %1373 = vmatprep.subr.mxu0 0.0
    %v1374 = vand.u32 %v20, 4294901760
    %v1375 = vsub.f32 %v20, %v1374
    %1376 = vmatpush1.msra.mxu0 %v1375
    %1377 = vmatprep.subr.mxu0 0.0
    %v1378 = vand.u32 %v21, 4294901760
    %v1379 = vsub.f32 %v21, %v1378
    %1380 = vmatpush1.msra.mxu0 %v1379
    %1381 = vmatprep.subr.mxu0 0.0
    %v1382 = vand.u32 %v22, 4294901760
    %v1383 = vsub.f32 %v22, %v1382
    %1384 = vmatpush1.msra.mxu0 %v1383
    %1385 = vmatprep.subr.mxu0 0.0
    %v1386 = vand.u32 %v23, 4294901760
    %v1387 = vsub.f32 %v23, %v1386
    %1388 = vmatpush1.msra.mxu0 %v1387
    %1389 = vmatprep.subr.mxu0 0.0
    %v1390 = vand.u32 %v24, 4294901760
    %v1391 = vsub.f32 %v24, %v1390
    %1392 = vmatpush1.msra.mxu0 %v1391
    %1393 = vmatprep.subr.mxu0 0.0
    %v1394 = vand.u32 %v25, 4294901760
    %v1395 = vsub.f32 %v25, %v1394
    %1396 = vmatpush1.msra.mxu0 %v1395
    %1397 = vmatprep.subr.mxu0 0.0
    %v1398 = vand.u32 %v26, 4294901760
    %v1399 = vsub.f32 %v26, %v1398
    %1400 = vmatpush1.msra.mxu0 %v1399
    %1401 = vmatprep.subr.mxu0 0.0
    %v1402 = vand.u32 %v27, 4294901760
    %v1403 = vsub.f32 %v27, %v1402
    %1404 = vmatpush1.msra.mxu0 %v1403
    %1405 = vmatprep.subr.mxu0 0.0
    %v1406 = vand.u32 %v28, 4294901760
    %v1407 = vsub.f32 %v28, %v1406
    %1408 = vmatpush1.msra.mxu0 %v1407
    %1409 = vmatprep.subr.mxu0 0.0
    %v1410 = vand.u32 %v29, 4294901760
    %v1411 = vsub.f32 %v29, %v1410
    %1412 = vmatpush1.msra.mxu0 %v1411
    %1413 = vmatprep.subr.mxu0 0.0
    %v1414 = vand.u32 %v30, 4294901760
    %v1415 = vsub.f32 %v30, %v1414
    %1416 = vmatpush1.msra.mxu0 %v1415
    %1417 = vmatprep.subr.mxu0 0.0
    %v1418 = vand.u32 %v31, 4294901760
    %v1419 = vsub.f32 %v31, %v1418
    %1420 = vmatpush1.msra.mxu0 %v1419
    %1421 = vmatprep.subr.mxu0 0.0
    %v1422 = vand.u32 %v32, 4294901760
    %v1423 = vsub.f32 %v32, %v1422
    %1424 = vmatpush1.msra.mxu0 %v1423
    %1425 = vmatprep.subr.mxu0 0.0
    %v1426 = vand.u32 %v33, 4294901760
    %v1427 = vsub.f32 %v33, %v1426
    %1428 = vmatpush1.msra.mxu0 %v1427
    %1429 = vmatprep.subr.mxu0 0.0
    %v1430 = vand.u32 %v34, 4294901760
    %v1431 = vsub.f32 %v34, %v1430
    %1432 = vmatpush1.msra.mxu0 %v1431
    %1433 = vmatprep.subr.mxu0 0.0
    %v1434 = vand.u32 %v35, 4294901760
    %v1435 = vsub.f32 %v35, %v1434
    %1436 = vmatpush1.msra.mxu0 %v1435
    %1437 = vmatprep.subr.mxu0 0.0
    %1438 = vmatpush1.msra.mxu0 0.0
    %1439 = vmatprep.subr.mxu0 0.0
    %1440 = vmatpush1.msra.mxu0 0.0
    %1441 = vmatprep.subr.mxu0 0.0
    %1442 = vmatpush1.msra.mxu0 0.0
    %1443 = vmatprep.subr.mxu0 0.0
    %1444 = vmatpush1.msra.mxu0 0.0
    %1445 = vmatprep.subr.mxu0 0.0
    %1446 = vmatpush1.msra.mxu0 0.0
    %1447 = vmatprep.subr.mxu0 0.0
    %1448 = vmatpush1.msra.mxu0 0.0
    %1449 = vmatprep.subr.mxu0 0.0
    %1450 = vmatpush1.msra.mxu0 0.0
    %1451 = vmatprep.subr.mxu0 0.0
    %1452 = vmatpush1.msra.mxu0 0.0
    %1453 = vmatprep.subr.mxu0 0.0
    %1454 = vmatpush1.msra.mxu0 0.0
    %1455 = vmatprep.subr.mxu0 0.0
    %1456 = vmatpush1.msra.mxu0 0.0
    %1457 = vmatprep.subr.mxu0 0.0
    %1458 = vmatpush1.msra.mxu0 0.0
    %1459 = vmatprep.subr.mxu0 0.0
    %1460 = vmatpush1.msra.mxu0 0.0
    %1461 = vmatprep.subr.mxu0 0.0
    %1462 = vmatpush1.msra.mxu0 0.0
    %1463 = vmatprep.subr.mxu0 0.0
    %1464 = vmatpush1.msra.mxu0 0.0
    %1465 = vmatprep.subr.mxu0 0.0
    %1466 = vmatpush1.msra.mxu0 0.0
    %1467 = vmatprep.subr.mxu0 0.0
    %1468 = vmatpush1.msra.mxu0 0.0
    %1469 = vmatprep.mubr.f32.mxu0 0.0
    %v1470 = vand.u32 %v1130, 4294901760
    %v1471 = vsub.f32 %v1130, %v1470
    %1472 = vmatmul.mubr.f32.gmra.mrb[0].mxu0 %v1471
    %v1473 = vpop.f32.mrb[0].mxu0
    %v1474 = vadd.f32 %v1370, %v1473
    %v1475 = vpop.f32.mrb[0].mxu0
    %1476 = vdwg.mxu0
    %1477 = vmatprep.subr.mxu0 0.0
    %v1478 = vand.u32 %v20, 4294901760
    %1479 = vmatpush1.msra.mxu0 %v1478
    %1480 = vmatprep.subr.mxu0 0.0
    %v1481 = vand.u32 %v21, 4294901760
    %1482 = vmatpush1.msra.mxu0 %v1481
    %1483 = vmatprep.subr.mxu0 0.0
    %v1484 = vand.u32 %v22, 4294901760
    %1485 = vmatpush1.msra.mxu0 %v1484
    %1486 = vmatprep.subr.mxu0 0.0
    %v1487 = vand.u32 %v23, 4294901760
    %1488 = vmatpush1.msra.mxu0 %v1487
    %1489 = vmatprep.subr.mxu0 0.0
    %v1490 = vand.u32 %v24, 4294901760
    %1491 = vmatpush1.msra.mxu0 %v1490
    %1492 = vmatprep.subr.mxu0 0.0
    %v1493 = vand.u32 %v25, 4294901760
    %1494 = vmatpush1.msra.mxu0 %v1493
    %1495 = vmatprep.subr.mxu0 0.0
    %v1496 = vand.u32 %v26, 4294901760
    %1497 = vmatpush1.msra.mxu0 %v1496
    %1498 = vmatprep.subr.mxu0 0.0
    %v1499 = vand.u32 %v27, 4294901760
    %1500 = vmatpush1.msra.mxu0 %v1499
    %1501 = vmatprep.subr.mxu0 0.0
    %v1502 = vand.u32 %v28, 4294901760
    %1503 = vmatpush1.msra.mxu0 %v1502
    %1504 = vmatprep.subr.mxu0 0.0
    %v1505 = vand.u32 %v29, 4294901760
    %1506 = vmatpush1.msra.mxu0 %v1505
    %1507 = vmatprep.subr.mxu0 0.0
    %v1508 = vand.u32 %v30, 4294901760
    %1509 = vmatpush1.msra.mxu0 %v1508
    %1510 = vmatprep.subr.mxu0 0.0
    %v1511 = vand.u32 %v31, 4294901760
    %1512 = vmatpush1.msra.mxu0 %v1511
    %1513 = vmatprep.subr.mxu0 0.0
    %v1514 = vand.u32 %v32, 4294901760
    %1515 = vmatpush1.msra.mxu0 %v1514
    %1516 = vmatprep.subr.mxu0 0.0
    %v1517 = vand.u32 %v33, 4294901760
    %1518 = vmatpush1.msra.mxu0 %v1517
    %1519 = vmatprep.subr.mxu0 0.0
    %v1520 = vand.u32 %v34, 4294901760
    %1521 = vmatpush1.msra.mxu0 %v1520
    %1522 = vmatprep.subr.mxu0 0.0
    %v1523 = vand.u32 %v35, 4294901760
    %1524 = vmatpush1.msra.mxu0 %v1523
    %1525 = vmatprep.subr.mxu0 0.0
    %1526 = vmatpush1.msra.mxu0 0.0
    %1527 = vmatprep.subr.mxu0 0.0
    %1528 = vmatpush1.msra.mxu0 0.0
    %1529 = vmatprep.subr.mxu0 0.0
    %1530 = vmatpush1.msra.mxu0 0.0
    %1531 = vmatprep.subr.mxu0 0.0
    %1532 = vmatpush1.msra.mxu0 0.0
    %1533 = vmatprep.subr.mxu0 0.0
    %1534 = vmatpush1.msra.mxu0 0.0
    %1535 = vmatprep.subr.mxu0 0.0
    %1536 = vmatpush1.msra.mxu0 0.0
    %1537 = vmatprep.subr.mxu0 0.0
    %1538 = vmatpush1.msra.mxu0 0.0
    %1539 = vmatprep.subr.mxu0 0.0
    %1540 = vmatpush1.msra.mxu0 0.0
    %1541 = vmatprep.subr.mxu0 0.0
    %1542 = vmatpush1.msra.mxu0 0.0
    %1543 = vmatprep.subr.mxu0 0.0
    %1544 = vmatpush1.msra.mxu0 0.0
    %1545 = vmatprep.subr.mxu0 0.0
    %1546 = vmatpush1.msra.mxu0 0.0
    %1547 = vmatprep.subr.mxu0 0.0
    %1548 = vmatpush1.msra.mxu0 0.0
    %1549 = vmatprep.subr.mxu0 0.0
    %1550 = vmatpush1.msra.mxu0 0.0
    %1551 = vmatprep.subr.mxu0 0.0
    %1552 = vmatpush1.msra.mxu0 0.0
    %1553 = vmatprep.subr.mxu0 0.0
    %1554 = vmatpush1.msra.mxu0 0.0
    %1555 = vmatprep.subr.mxu0 0.0
    %1556 = vmatpush1.msra.mxu0 0.0
    %1557 = vmatprep.mubr.f32.mxu0 0.0
    %v1558 = vand.u32 %v1130, 4294901760
    %v1559 = vsub.f32 %v1130, %v1558
    %v1560 = vand.u32 %v1559, 4294901760
    %1561 = vmatmul.mubr.f32.gmra.mrb[0].mxu0 %v1560
    %v1562 = vpop.f32.mrb[0].mxu0
    %v1563 = vadd.f32 %v1474, %v1562
    %v1564 = vpop.f32.mrb[0].mxu0
    %1565 = vdwg.mxu0
    %1566 = vmatprep.subr.mxu0 0.0
    %v1567 = vand.u32 %v20, 4294901760
    %v1568 = vsub.f32 %v20, %v1567
    %v1569 = vand.u32 %v1568, 4294901760
    %1570 = vmatpush1.msra.mxu0 %v1569
    %1571 = vmatprep.subr.mxu0 0.0
    %v1572 = vand.u32 %v21, 4294901760
    %v1573 = vsub.f32 %v21, %v1572
    %v1574 = vand.u32 %v1573, 4294901760
    %1575 = vmatpush1.msra.mxu0 %v1574
    %1576 = vmatprep.subr.mxu0 0.0
    %v1577 = vand.u32 %v22, 4294901760
    %v1578 = vsub.f32 %v22, %v1577
    %v1579 = vand.u32 %v1578, 4294901760
    %1580 = vmatpush1.msra.mxu0 %v1579
    %1581 = vmatprep.subr.mxu0 0.0
    %v1582 = vand.u32 %v23, 4294901760
    %v1583 = vsub.f32 %v23, %v1582
    %v1584 = vand.u32 %v1583, 4294901760
    %1585 = vmatpush1.msra.mxu0 %v1584
    %1586 = vmatprep.subr.mxu0 0.0
    %v1587 = vand.u32 %v24, 4294901760
    %v1588 = vsub.f32 %v24, %v1587
    %v1589 = vand.u32 %v1588, 4294901760
    %1590 = vmatpush1.msra.mxu0 %v1589
    %1591 = vmatprep.subr.mxu0 0.0
    %v1592 = vand.u32 %v25, 4294901760
    %v1593 = vsub.f32 %v25, %v1592
    %v1594 = vand.u32 %v1593, 4294901760
    %1595 = vmatpush1.msra.mxu0 %v1594
    %1596 = vmatprep.subr.mxu0 0.0
    %v1597 = vand.u32 %v26, 4294901760
    %v1598 = vsub.f32 %v26, %v1597
    %v1599 = vand.u32 %v1598, 4294901760
    %1600 = vmatpush1.msra.mxu0 %v1599
    %1601 = vmatprep.subr.mxu0 0.0
    %v1602 = vand.u32 %v27, 4294901760
    %v1603 = vsub.f32 %v27, %v1602
    %v1604 = vand.u32 %v1603, 4294901760
    %1605 = vmatpush1.msra.mxu0 %v1604
    %1606 = vmatprep.subr.mxu0 0.0
    %v1607 = vand.u32 %v28, 4294901760
    %v1608 = vsub.f32 %v28, %v1607
    %v1609 = vand.u32 %v1608, 4294901760
    %1610 = vmatpush1.msra.mxu0 %v1609
    %1611 = vmatprep.subr.mxu0 0.0
    %v1612 = vand.u32 %v29, 4294901760
    %v1613 = vsub.f32 %v29, %v1612
    %v1614 = vand.u32 %v1613, 4294901760
    %1615 = vmatpush1.msra.mxu0 %v1614
    %1616 = vmatprep.subr.mxu0 0.0
    %v1617 = vand.u32 %v30, 4294901760
    %v1618 = vsub.f32 %v30, %v1617
    %v1619 = vand.u32 %v1618, 4294901760
    %1620 = vmatpush1.msra.mxu0 %v1619
    %1621 = vmatprep.subr.mxu0 0.0
    %v1622 = vand.u32 %v31, 4294901760
    %v1623 = vsub.f32 %v31, %v1622
    %v1624 = vand.u32 %v1623, 4294901760
    %1625 = vmatpush1.msra.mxu0 %v1624
    %1626 = vmatprep.subr.mxu0 0.0
    %v1627 = vand.u32 %v32, 4294901760
    %v1628 = vsub.f32 %v32, %v1627
    %v1629 = vand.u32 %v1628, 4294901760
    %1630 = vmatpush1.msra.mxu0 %v1629
    %1631 = vmatprep.subr.mxu0 0.0
    %v1632 = vand.u32 %v33, 4294901760
    %v1633 = vsub.f32 %v33, %v1632
    %v1634 = vand.u32 %v1633, 4294901760
    %1635 = vmatpush1.msra.mxu0 %v1634
    %1636 = vmatprep.subr.mxu0 0.0
    %v1637 = vand.u32 %v34, 4294901760
    %v1638 = vsub.f32 %v34, %v1637
    %v1639 = vand.u32 %v1638, 4294901760
    %1640 = vmatpush1.msra.mxu0 %v1639
    %1641 = vmatprep.subr.mxu0 0.0
    %v1642 = vand.u32 %v35, 4294901760
    %v1643 = vsub.f32 %v35, %v1642
    %v1644 = vand.u32 %v1643, 4294901760
    %1645 = vmatpush1.msra.mxu0 %v1644
    %1646 = vmatprep.subr.mxu0 0.0
    %1647 = vmatpush1.msra.mxu0 0.0
    %1648 = vmatprep.subr.mxu0 0.0
    %1649 = vmatpush1.msra.mxu0 0.0
    %1650 = vmatprep.subr.mxu0 0.0
    %1651 = vmatpush1.msra.mxu0 0.0
    %1652 = vmatprep.subr.mxu0 0.0
    %1653 = vmatpush1.msra.mxu0 0.0
    %1654 = vmatprep.subr.mxu0 0.0
    %1655 = vmatpush1.msra.mxu0 0.0
    %1656 = vmatprep.subr.mxu0 0.0
    %1657 = vmatpush1.msra.mxu0 0.0
    %1658 = vmatprep.subr.mxu0 0.0
    %1659 = vmatpush1.msra.mxu0 0.0
    %1660 = vmatprep.subr.mxu0 0.0
    %1661 = vmatpush1.msra.mxu0 0.0
    %1662 = vmatprep.subr.mxu0 0.0
    %1663 = vmatpush1.msra.mxu0 0.0
    %1664 = vmatprep.subr.mxu0 0.0
    %1665 = vmatpush1.msra.mxu0 0.0
    %1666 = vmatprep.subr.mxu0 0.0
    %1667 = vmatpush1.msra.mxu0 0.0
    %1668 = vmatprep.subr.mxu0 0.0
    %1669 = vmatpush1.msra.mxu0 0.0
    %1670 = vmatprep.subr.mxu0 0.0
    %1671 = vmatpush1.msra.mxu0 0.0
    %1672 = vmatprep.subr.mxu0 0.0
    %1673 = vmatpush1.msra.mxu0 0.0
    %1674 = vmatprep.subr.mxu0 0.0
    %1675 = vmatpush1.msra.mxu0 0.0
    %1676 = vmatprep.subr.mxu0 0.0
    %1677 = vmatpush1.msra.mxu0 0.0
    %1678 = vmatprep.mubr.f32.mxu0 0.0
    %v1679 = vand.u32 %v1130, 4294901760
    %1680 = vmatmul.mubr.f32.gmra.mrb[0].mxu0 %v1679
    %v1681 = vpop.f32.mrb[0].mxu0
    %v1682 = vadd.f32 %v1563, %v1681
    %v1683 = vpop.f32.mrb[0].mxu0
    %1684 = vdwg.mxu0
    %1685 = vmatprep.subr.mxu0 0.0
    %v1686 = vand.u32 %v20, 4294901760
    %1687 = vmatpush1.msra.mxu0 %v1686
    %1688 = vmatprep.subr.mxu0 0.0
    %v1689 = vand.u32 %v21, 4294901760
    %1690 = vmatpush1.msra.mxu0 %v1689
    %1691 = vmatprep.subr.mxu0 0.0
    %v1692 = vand.u32 %v22, 4294901760
    %1693 = vmatpush1.msra.mxu0 %v1692
    %1694 = vmatprep.subr.mxu0 0.0
    %v1695 = vand.u32 %v23, 4294901760
    %1696 = vmatpush1.msra.mxu0 %v1695
    %1697 = vmatprep.subr.mxu0 0.0
    %v1698 = vand.u32 %v24, 4294901760
    %1699 = vmatpush1.msra.mxu0 %v1698
    %1700 = vmatprep.subr.mxu0 0.0
    %v1701 = vand.u32 %v25, 4294901760
    %1702 = vmatpush1.msra.mxu0 %v1701
    %1703 = vmatprep.subr.mxu0 0.0
    %v1704 = vand.u32 %v26, 4294901760
    %1705 = vmatpush1.msra.mxu0 %v1704
    %1706 = vmatprep.subr.mxu0 0.0
    %v1707 = vand.u32 %v27, 4294901760
    %1708 = vmatpush1.msra.mxu0 %v1707
    %1709 = vmatprep.subr.mxu0 0.0
    %v1710 = vand.u32 %v28, 4294901760
    %1711 = vmatpush1.msra.mxu0 %v1710
    %1712 = vmatprep.subr.mxu0 0.0
    %v1713 = vand.u32 %v29, 4294901760
    %1714 = vmatpush1.msra.mxu0 %v1713
    %1715 = vmatprep.subr.mxu0 0.0
    %v1716 = vand.u32 %v30, 4294901760
    %1717 = vmatpush1.msra.mxu0 %v1716
    %1718 = vmatprep.subr.mxu0 0.0
    %v1719 = vand.u32 %v31, 4294901760
    %1720 = vmatpush1.msra.mxu0 %v1719
    %1721 = vmatprep.subr.mxu0 0.0
    %v1722 = vand.u32 %v32, 4294901760
    %1723 = vmatpush1.msra.mxu0 %v1722
    %1724 = vmatprep.subr.mxu0 0.0
    %v1725 = vand.u32 %v33, 4294901760
    %1726 = vmatpush1.msra.mxu0 %v1725
    %1727 = vmatprep.subr.mxu0 0.0
    %v1728 = vand.u32 %v34, 4294901760
    %1729 = vmatpush1.msra.mxu0 %v1728
    %1730 = vmatprep.subr.mxu0 0.0
    %v1731 = vand.u32 %v35, 4294901760
    %1732 = vmatpush1.msra.mxu0 %v1731
    %1733 = vmatprep.subr.mxu0 0.0
    %1734 = vmatpush1.msra.mxu0 0.0
    %1735 = vmatprep.subr.mxu0 0.0
    %1736 = vmatpush1.msra.mxu0 0.0
    %1737 = vmatprep.subr.mxu0 0.0
    %1738 = vmatpush1.msra.mxu0 0.0
    %1739 = vmatprep.subr.mxu0 0.0
    %1740 = vmatpush1.msra.mxu0 0.0
    %1741 = vmatprep.subr.mxu0 0.0
    %1742 = vmatpush1.msra.mxu0 0.0
    %1743 = vmatprep.subr.mxu0 0.0
    %1744 = vmatpush1.msra.mxu0 0.0
    %1745 = vmatprep.subr.mxu0 0.0
    %1746 = vmatpush1.msra.mxu0 0.0
    %1747 = vmatprep.subr.mxu0 0.0
    %1748 = vmatpush1.msra.mxu0 0.0
    %1749 = vmatprep.subr.mxu0 0.0
    %1750 = vmatpush1.msra.mxu0 0.0
    %1751 = vmatprep.subr.mxu0 0.0
    %1752 = vmatpush1.msra.mxu0 0.0
    %1753 = vmatprep.subr.mxu0 0.0
    %1754 = vmatpush1.msra.mxu0 0.0
    %1755 = vmatprep.subr.mxu0 0.0
    %1756 = vmatpush1.msra.mxu0 0.0
    %1757 = vmatprep.subr.mxu0 0.0
    %1758 = vmatpush1.msra.mxu0 0.0
    %1759 = vmatprep.subr.mxu0 0.0
    %1760 = vmatpush1.msra.mxu0 0.0
    %1761 = vmatprep.subr.mxu0 0.0
    %1762 = vmatpush1.msra.mxu0 0.0
    %1763 = vmatprep.subr.mxu0 0.0
    %1764 = vmatpush1.msra.mxu0 0.0
    %1765 = vmatprep.mubr.f32.mxu0 0.0
    %v1766 = vand.u32 %v1130, 4294901760
    %1767 = vmatmul.mubr.f32.gmra.mrb[0].mxu0 %v1766
    %v1768 = vpop.f32.mrb[0].mxu0
    %v1769 = vadd.f32 %v1682, %v1768
    %v1770 = vpop.f32.mrb[0].mxu0
    %1771 = vdwg.mxu0
    %v1772 = vmul.f32 %v1769, 0.03125
    %v1773 = vadd.f32 %v1772, 1e-05
    %v1774 = vrsqrt.pop %v1773
    %v1776 = vsel %vm679, %v1774, 0
    %1778 = vmatprep.subr.mxu0 0.0
    %v1779 = vand.u32 %v36, 4294901760
    %1780 = vmatpush1.msra.mxu0 %v1779
    %1781 = vmatprep.subr.mxu0 0.0
    %1782 = vmatpush1.msra.mxu0 0.0
    %1783 = vmatprep.subr.mxu0 0.0
    %1784 = vmatpush1.msra.mxu0 0.0
    %1785 = vmatprep.subr.mxu0 0.0
    %1786 = vmatpush1.msra.mxu0 0.0
    %1787 = vmatprep.subr.mxu0 0.0
    %1788 = vmatpush1.msra.mxu0 0.0
    %1789 = vmatprep.subr.mxu0 0.0
    %1790 = vmatpush1.msra.mxu0 0.0
    %1791 = vmatprep.subr.mxu0 0.0
    %1792 = vmatpush1.msra.mxu0 0.0
    %1793 = vmatprep.subr.mxu0 0.0
    %1794 = vmatpush1.msra.mxu0 0.0
    %1795 = vmatprep.subr.mxu0 0.0
    %1796 = vmatpush1.msra.mxu0 0.0
    %1797 = vmatprep.subr.mxu0 0.0
    %1798 = vmatpush1.msra.mxu0 0.0
    %1799 = vmatprep.subr.mxu0 0.0
    %1800 = vmatpush1.msra.mxu0 0.0
    %1801 = vmatprep.subr.mxu0 0.0
    %1802 = vmatpush1.msra.mxu0 0.0
    %1803 = vmatprep.subr.mxu0 0.0
    %1804 = vmatpush1.msra.mxu0 0.0
    %1805 = vmatprep.subr.mxu0 0.0
    %1806 = vmatpush1.msra.mxu0 0.0
    %1807 = vmatprep.subr.mxu0 0.0
    %1808 = vmatpush1.msra.mxu0 0.0
    %1809 = vmatprep.subr.mxu0 0.0
    %1810 = vmatpush1.msra.mxu0 0.0
    %1811 = vmatprep.subr.mxu0 0.0
    %1812 = vmatpush1.msra.mxu0 0.0
    %1813 = vmatprep.subr.mxu0 0.0
    %1814 = vmatpush1.msra.mxu0 0.0
    %1815 = vmatprep.subr.mxu0 0.0
    %1816 = vmatpush1.msra.mxu0 0.0
    %1817 = vmatprep.subr.mxu0 0.0
    %1818 = vmatpush1.msra.mxu0 0.0
    %1819 = vmatprep.subr.mxu0 0.0
    %1820 = vmatpush1.msra.mxu0 0.0
    %1821 = vmatprep.subr.mxu0 0.0
    %1822 = vmatpush1.msra.mxu0 0.0
    %1823 = vmatprep.subr.mxu0 0.0
    %1824 = vmatpush1.msra.mxu0 0.0
    %1825 = vmatprep.subr.mxu0 0.0
    %1826 = vmatpush1.msra.mxu0 0.0
    %1827 = vmatprep.subr.mxu0 0.0
    %1828 = vmatpush1.msra.mxu0 0.0
    %1829 = vmatprep.subr.mxu0 0.0
    %1830 = vmatpush1.msra.mxu0 0.0
    %1831 = vmatprep.subr.mxu0 0.0
    %1832 = vmatpush1.msra.mxu0 0.0
    %1833 = vmatprep.subr.mxu0 0.0
    %1834 = vmatpush1.msra.mxu0 0.0
    %1835 = vmatprep.subr.mxu0 0.0
    %1836 = vmatpush1.msra.mxu0 0.0
    %1837 = vmatprep.subr.mxu0 0.0
    %1838 = vmatpush1.msra.mxu0 0.0
    %1839 = vmatprep.subr.mxu0 0.0
    %1840 = vmatpush1.msra.mxu0 0.0
    %1841 = vmatprep.subr.mxu0 0.0
    %1842 = vmatpush1.msra.mxu0 0.0
    %1843 = vmatprep.mubr.f32.mxu0 0.0
    %v1844 = vand.u32 %v1776, 4294901760
    %v1845 = vsub.f32 %v1776, %v1844
    %v1846 = vand.u32 %v1845, 4294901760
    %v1847 = vsub.f32 %v1845, %v1846
    %v1848 = vand.u32 %v1847, 4294901760
    %1849 = vmatmul.mubr.f32.gmra.mrb[0].mxu0 %v1848
    %v1850 = vpop.f32.mrb[0].mxu0
    %v1851 = vadd.f32 0.0, %v1850
    %v1852 = vpop.f32.mrb[0].mxu0
    %1853 = vdwg.mxu0
    %1854 = vmatprep.subr.mxu0 0.0
    %v1855 = vand.u32 %v36, 4294901760
    %v1856 = vsub.f32 %v36, %v1855
    %v1857 = vand.u32 %v1856, 4294901760
    %v1858 = vsub.f32 %v1856, %v1857
    %v1859 = vand.u32 %v1858, 4294901760
    %1860 = vmatpush1.msra.mxu0 %v1859
    %1861 = vmatprep.subr.mxu0 0.0
    %1862 = vmatpush1.msra.mxu0 0.0
    %1863 = vmatprep.subr.mxu0 0.0
    %1864 = vmatpush1.msra.mxu0 0.0
    %1865 = vmatprep.subr.mxu0 0.0
    %1866 = vmatpush1.msra.mxu0 0.0
    %1867 = vmatprep.subr.mxu0 0.0
    %1868 = vmatpush1.msra.mxu0 0.0
    %1869 = vmatprep.subr.mxu0 0.0
    %1870 = vmatpush1.msra.mxu0 0.0
    %1871 = vmatprep.subr.mxu0 0.0
    %1872 = vmatpush1.msra.mxu0 0.0
    %1873 = vmatprep.subr.mxu0 0.0
    %1874 = vmatpush1.msra.mxu0 0.0
    %1875 = vmatprep.subr.mxu0 0.0
    %1876 = vmatpush1.msra.mxu0 0.0
    %1877 = vmatprep.subr.mxu0 0.0
    %1878 = vmatpush1.msra.mxu0 0.0
    %1879 = vmatprep.subr.mxu0 0.0
    %1880 = vmatpush1.msra.mxu0 0.0
    %1881 = vmatprep.subr.mxu0 0.0
    %1882 = vmatpush1.msra.mxu0 0.0
    %1883 = vmatprep.subr.mxu0 0.0
    %1884 = vmatpush1.msra.mxu0 0.0
    %1885 = vmatprep.subr.mxu0 0.0
    %1886 = vmatpush1.msra.mxu0 0.0
    %1887 = vmatprep.subr.mxu0 0.0
    %1888 = vmatpush1.msra.mxu0 0.0
    %1889 = vmatprep.subr.mxu0 0.0
    %1890 = vmatpush1.msra.mxu0 0.0
    %1891 = vmatprep.subr.mxu0 0.0
    %1892 = vmatpush1.msra.mxu0 0.0
    %1893 = vmatprep.subr.mxu0 0.0
    %1894 = vmatpush1.msra.mxu0 0.0
    %1895 = vmatprep.subr.mxu0 0.0
    %1896 = vmatpush1.msra.mxu0 0.0
    %1897 = vmatprep.subr.mxu0 0.0
    %1898 = vmatpush1.msra.mxu0 0.0
    %1899 = vmatprep.subr.mxu0 0.0
    %1900 = vmatpush1.msra.mxu0 0.0
    %1901 = vmatprep.subr.mxu0 0.0
    %1902 = vmatpush1.msra.mxu0 0.0
    %1903 = vmatprep.subr.mxu0 0.0
    %1904 = vmatpush1.msra.mxu0 0.0
    %1905 = vmatprep.subr.mxu0 0.0
    %1906 = vmatpush1.msra.mxu0 0.0
    %1907 = vmatprep.subr.mxu0 0.0
    %1908 = vmatpush1.msra.mxu0 0.0
    %1909 = vmatprep.subr.mxu0 0.0
    %1910 = vmatpush1.msra.mxu0 0.0
    %1911 = vmatprep.subr.mxu0 0.0
    %1912 = vmatpush1.msra.mxu0 0.0
    %1913 = vmatprep.subr.mxu0 0.0
    %1914 = vmatpush1.msra.mxu0 0.0
    %1915 = vmatprep.subr.mxu0 0.0
    %1916 = vmatpush1.msra.mxu0 0.0
    %1917 = vmatprep.subr.mxu0 0.0
    %1918 = vmatpush1.msra.mxu0 0.0
    %1919 = vmatprep.subr.mxu0 0.0
    %1920 = vmatpush1.msra.mxu0 0.0
    %1921 = vmatprep.subr.mxu0 0.0
    %1922 = vmatpush1.msra.mxu0 0.0
    %1923 = vmatprep.mubr.f32.mxu0 0.0
    %v1924 = vand.u32 %v1776, 4294901760
    %1925 = vmatmul.mubr.f32.gmra.mrb[0].mxu0 %v1924
    %v1926 = vpop.f32.mrb[0].mxu0
    %v1927 = vadd.f32 %v1851, %v1926
    %v1928 = vpop.f32.mrb[0].mxu0
    %1929 = vdwg.mxu0
    %1930 = vmatprep.subr.mxu0 0.0
    %v1931 = vand.u32 %v36, 4294901760
    %v1932 = vsub.f32 %v36, %v1931
    %1933 = vmatpush1.msra.mxu0 %v1932
    %1934 = vmatprep.subr.mxu0 0.0
    %1935 = vmatpush1.msra.mxu0 0.0
    %1936 = vmatprep.subr.mxu0 0.0
    %1937 = vmatpush1.msra.mxu0 0.0
    %1938 = vmatprep.subr.mxu0 0.0
    %1939 = vmatpush1.msra.mxu0 0.0
    %1940 = vmatprep.subr.mxu0 0.0
    %1941 = vmatpush1.msra.mxu0 0.0
    %1942 = vmatprep.subr.mxu0 0.0
    %1943 = vmatpush1.msra.mxu0 0.0
    %1944 = vmatprep.subr.mxu0 0.0
    %1945 = vmatpush1.msra.mxu0 0.0
    %1946 = vmatprep.subr.mxu0 0.0
    %1947 = vmatpush1.msra.mxu0 0.0
    %1948 = vmatprep.subr.mxu0 0.0
    %1949 = vmatpush1.msra.mxu0 0.0
    %1950 = vmatprep.subr.mxu0 0.0
    %1951 = vmatpush1.msra.mxu0 0.0
    %1952 = vmatprep.subr.mxu0 0.0
    %1953 = vmatpush1.msra.mxu0 0.0
    %1954 = vmatprep.subr.mxu0 0.0
    %1955 = vmatpush1.msra.mxu0 0.0
    %1956 = vmatprep.subr.mxu0 0.0
    %1957 = vmatpush1.msra.mxu0 0.0
    %1958 = vmatprep.subr.mxu0 0.0
    %1959 = vmatpush1.msra.mxu0 0.0
    %1960 = vmatprep.subr.mxu0 0.0
    %1961 = vmatpush1.msra.mxu0 0.0
    %1962 = vmatprep.subr.mxu0 0.0
    %1963 = vmatpush1.msra.mxu0 0.0
    %1964 = vmatprep.subr.mxu0 0.0
    %1965 = vmatpush1.msra.mxu0 0.0
    %1966 = vmatprep.subr.mxu0 0.0
    %1967 = vmatpush1.msra.mxu0 0.0
    %1968 = vmatprep.subr.mxu0 0.0
    %1969 = vmatpush1.msra.mxu0 0.0
    %1970 = vmatprep.subr.mxu0 0.0
    %1971 = vmatpush1.msra.mxu0 0.0
    %1972 = vmatprep.subr.mxu0 0.0
    %1973 = vmatpush1.msra.mxu0 0.0
    %1974 = vmatprep.subr.mxu0 0.0
    %1975 = vmatpush1.msra.mxu0 0.0
    %1976 = vmatprep.subr.mxu0 0.0
    %1977 = vmatpush1.msra.mxu0 0.0
    %1978 = vmatprep.subr.mxu0 0.0
    %1979 = vmatpush1.msra.mxu0 0.0
    %1980 = vmatprep.subr.mxu0 0.0
    %1981 = vmatpush1.msra.mxu0 0.0
    %1982 = vmatprep.subr.mxu0 0.0
    %1983 = vmatpush1.msra.mxu0 0.0
    %1984 = vmatprep.subr.mxu0 0.0
    %1985 = vmatpush1.msra.mxu0 0.0
    %1986 = vmatprep.subr.mxu0 0.0
    %1987 = vmatpush1.msra.mxu0 0.0
    %1988 = vmatprep.subr.mxu0 0.0
    %1989 = vmatpush1.msra.mxu0 0.0
    %1990 = vmatprep.subr.mxu0 0.0
    %1991 = vmatpush1.msra.mxu0 0.0
    %1992 = vmatprep.subr.mxu0 0.0
    %1993 = vmatpush1.msra.mxu0 0.0
    %1994 = vmatprep.subr.mxu0 0.0
    %1995 = vmatpush1.msra.mxu0 0.0
    %1996 = vmatprep.mubr.f32.mxu0 0.0
    %v1997 = vand.u32 %v1776, 4294901760
    %v1998 = vsub.f32 %v1776, %v1997
    %1999 = vmatmul.mubr.f32.gmra.mrb[0].mxu0 %v1998
    %v2000 = vpop.f32.mrb[0].mxu0
    %v2001 = vadd.f32 %v1927, %v2000
    %v2002 = vpop.f32.mrb[0].mxu0
    %2003 = vdwg.mxu0
    %2004 = vmatprep.subr.mxu0 0.0
    %v2005 = vand.u32 %v36, 4294901760
    %2006 = vmatpush1.msra.mxu0 %v2005
    %2007 = vmatprep.subr.mxu0 0.0
    %2008 = vmatpush1.msra.mxu0 0.0
    %2009 = vmatprep.subr.mxu0 0.0
    %2010 = vmatpush1.msra.mxu0 0.0
    %2011 = vmatprep.subr.mxu0 0.0
    %2012 = vmatpush1.msra.mxu0 0.0
    %2013 = vmatprep.subr.mxu0 0.0
    %2014 = vmatpush1.msra.mxu0 0.0
    %2015 = vmatprep.subr.mxu0 0.0
    %2016 = vmatpush1.msra.mxu0 0.0
    %2017 = vmatprep.subr.mxu0 0.0
    %2018 = vmatpush1.msra.mxu0 0.0
    %2019 = vmatprep.subr.mxu0 0.0
    %2020 = vmatpush1.msra.mxu0 0.0
    %2021 = vmatprep.subr.mxu0 0.0
    %2022 = vmatpush1.msra.mxu0 0.0
    %2023 = vmatprep.subr.mxu0 0.0
    %2024 = vmatpush1.msra.mxu0 0.0
    %2025 = vmatprep.subr.mxu0 0.0
    %2026 = vmatpush1.msra.mxu0 0.0
    %2027 = vmatprep.subr.mxu0 0.0
    %2028 = vmatpush1.msra.mxu0 0.0
    %2029 = vmatprep.subr.mxu0 0.0
    %2030 = vmatpush1.msra.mxu0 0.0
    %2031 = vmatprep.subr.mxu0 0.0
    %2032 = vmatpush1.msra.mxu0 0.0
    %2033 = vmatprep.subr.mxu0 0.0
    %2034 = vmatpush1.msra.mxu0 0.0
    %2035 = vmatprep.subr.mxu0 0.0
    %2036 = vmatpush1.msra.mxu0 0.0
    %2037 = vmatprep.subr.mxu0 0.0
    %2038 = vmatpush1.msra.mxu0 0.0
    %2039 = vmatprep.subr.mxu0 0.0
    %2040 = vmatpush1.msra.mxu0 0.0
    %2041 = vmatprep.subr.mxu0 0.0
    %2042 = vmatpush1.msra.mxu0 0.0
    %2043 = vmatprep.subr.mxu0 0.0
    %2044 = vmatpush1.msra.mxu0 0.0
    %2045 = vmatprep.subr.mxu0 0.0
    %2046 = vmatpush1.msra.mxu0 0.0
    %2047 = vmatprep.subr.mxu0 0.0
    %2048 = vmatpush1.msra.mxu0 0.0
    %2049 = vmatprep.subr.mxu0 0.0
    %2050 = vmatpush1.msra.mxu0 0.0
    %2051 = vmatprep.subr.mxu0 0.0
    %2052 = vmatpush1.msra.mxu0 0.0
    %2053 = vmatprep.subr.mxu0 0.0
    %2054 = vmatpush1.msra.mxu0 0.0
    %2055 = vmatprep.subr.mxu0 0.0
    %2056 = vmatpush1.msra.mxu0 0.0
    %2057 = vmatprep.subr.mxu0 0.0
    %2058 = vmatpush1.msra.mxu0 0.0
    %2059 = vmatprep.subr.mxu0 0.0
    %2060 = vmatpush1.msra.mxu0 0.0
    %2061 = vmatprep.subr.mxu0 0.0
    %2062 = vmatpush1.msra.mxu0 0.0
    %2063 = vmatprep.subr.mxu0 0.0
    %2064 = vmatpush1.msra.mxu0 0.0
    %2065 = vmatprep.subr.mxu0 0.0
    %2066 = vmatpush1.msra.mxu0 0.0
    %2067 = vmatprep.subr.mxu0 0.0
    %2068 = vmatpush1.msra.mxu0 0.0
    %2069 = vmatprep.mubr.f32.mxu0 0.0
    %v2070 = vand.u32 %v1776, 4294901760
    %v2071 = vsub.f32 %v1776, %v2070
    %v2072 = vand.u32 %v2071, 4294901760
    %2073 = vmatmul.mubr.f32.gmra.mrb[0].mxu0 %v2072
    %v2074 = vpop.f32.mrb[0].mxu0
    %v2075 = vadd.f32 %v2001, %v2074
    %v2076 = vpop.f32.mrb[0].mxu0
    %2077 = vdwg.mxu0
    %2078 = vmatprep.subr.mxu0 0.0
    %v2079 = vand.u32 %v36, 4294901760
    %v2080 = vsub.f32 %v36, %v2079
    %v2081 = vand.u32 %v2080, 4294901760
    %2082 = vmatpush1.msra.mxu0 %v2081
    %2083 = vmatprep.subr.mxu0 0.0
    %2084 = vmatpush1.msra.mxu0 0.0
    %2085 = vmatprep.subr.mxu0 0.0
    %2086 = vmatpush1.msra.mxu0 0.0
    %2087 = vmatprep.subr.mxu0 0.0
    %2088 = vmatpush1.msra.mxu0 0.0
    %2089 = vmatprep.subr.mxu0 0.0
    %2090 = vmatpush1.msra.mxu0 0.0
    %2091 = vmatprep.subr.mxu0 0.0
    %2092 = vmatpush1.msra.mxu0 0.0
    %2093 = vmatprep.subr.mxu0 0.0
    %2094 = vmatpush1.msra.mxu0 0.0
    %2095 = vmatprep.subr.mxu0 0.0
    %2096 = vmatpush1.msra.mxu0 0.0
    %2097 = vmatprep.subr.mxu0 0.0
    %2098 = vmatpush1.msra.mxu0 0.0
    %2099 = vmatprep.subr.mxu0 0.0
    %2100 = vmatpush1.msra.mxu0 0.0
    %2101 = vmatprep.subr.mxu0 0.0
    %2102 = vmatpush1.msra.mxu0 0.0
    %2103 = vmatprep.subr.mxu0 0.0
    %2104 = vmatpush1.msra.mxu0 0.0
    %2105 = vmatprep.subr.mxu0 0.0
    %2106 = vmatpush1.msra.mxu0 0.0
    %2107 = vmatprep.subr.mxu0 0.0
    %2108 = vmatpush1.msra.mxu0 0.0
    %2109 = vmatprep.subr.mxu0 0.0
    %2110 = vmatpush1.msra.mxu0 0.0
    %2111 = vmatprep.subr.mxu0 0.0
    %2112 = vmatpush1.msra.mxu0 0.0
    %2113 = vmatprep.subr.mxu0 0.0
    %2114 = vmatpush1.msra.mxu0 0.0
    %2115 = vmatprep.subr.mxu0 0.0
    %2116 = vmatpush1.msra.mxu0 0.0
    %2117 = vmatprep.subr.mxu0 0.0
    %2118 = vmatpush1.msra.mxu0 0.0
    %2119 = vmatprep.subr.mxu0 0.0
    %2120 = vmatpush1.msra.mxu0 0.0
    %2121 = vmatprep.subr.mxu0 0.0
    %2122 = vmatpush1.msra.mxu0 0.0
    %2123 = vmatprep.subr.mxu0 0.0
    %2124 = vmatpush1.msra.mxu0 0.0
    %2125 = vmatprep.subr.mxu0 0.0
    %2126 = vmatpush1.msra.mxu0 0.0
    %2127 = vmatprep.subr.mxu0 0.0
    %2128 = vmatpush1.msra.mxu0 0.0
    %2129 = vmatprep.subr.mxu0 0.0
    %2130 = vmatpush1.msra.mxu0 0.0
    %2131 = vmatprep.subr.mxu0 0.0
    %2132 = vmatpush1.msra.mxu0 0.0
    %2133 = vmatprep.subr.mxu0 0.0
    %2134 = vmatpush1.msra.mxu0 0.0
    %2135 = vmatprep.subr.mxu0 0.0
    %2136 = vmatpush1.msra.mxu0 0.0
    %2137 = vmatprep.subr.mxu0 0.0
    %2138 = vmatpush1.msra.mxu0 0.0
    %2139 = vmatprep.subr.mxu0 0.0
    %2140 = vmatpush1.msra.mxu0 0.0
    %2141 = vmatprep.subr.mxu0 0.0
    %2142 = vmatpush1.msra.mxu0 0.0
    %2143 = vmatprep.subr.mxu0 0.0
    %2144 = vmatpush1.msra.mxu0 0.0
    %2145 = vmatprep.mubr.f32.mxu0 0.0
    %v2146 = vand.u32 %v1776, 4294901760
    %2147 = vmatmul.mubr.f32.gmra.mrb[0].mxu0 %v2146
    %v2148 = vpop.f32.mrb[0].mxu0
    %v2149 = vadd.f32 %v2075, %v2148
    %v2150 = vpop.f32.mrb[0].mxu0
    %2151 = vdwg.mxu0
    %2152 = vmatprep.subr.mxu0 0.0
    %v2153 = vand.u32 %v36, 4294901760
    %2154 = vmatpush1.msra.mxu0 %v2153
    %2155 = vmatprep.subr.mxu0 0.0
    %2156 = vmatpush1.msra.mxu0 0.0
    %2157 = vmatprep.subr.mxu0 0.0
    %2158 = vmatpush1.msra.mxu0 0.0
    %2159 = vmatprep.subr.mxu0 0.0
    %2160 = vmatpush1.msra.mxu0 0.0
    %2161 = vmatprep.subr.mxu0 0.0
    %2162 = vmatpush1.msra.mxu0 0.0
    %2163 = vmatprep.subr.mxu0 0.0
    %2164 = vmatpush1.msra.mxu0 0.0
    %2165 = vmatprep.subr.mxu0 0.0
    %2166 = vmatpush1.msra.mxu0 0.0
    %2167 = vmatprep.subr.mxu0 0.0
    %2168 = vmatpush1.msra.mxu0 0.0
    %2169 = vmatprep.subr.mxu0 0.0
    %2170 = vmatpush1.msra.mxu0 0.0
    %2171 = vmatprep.subr.mxu0 0.0
    %2172 = vmatpush1.msra.mxu0 0.0
    %2173 = vmatprep.subr.mxu0 0.0
    %2174 = vmatpush1.msra.mxu0 0.0
    %2175 = vmatprep.subr.mxu0 0.0
    %2176 = vmatpush1.msra.mxu0 0.0
    %2177 = vmatprep.subr.mxu0 0.0
    %2178 = vmatpush1.msra.mxu0 0.0
    %2179 = vmatprep.subr.mxu0 0.0
    %2180 = vmatpush1.msra.mxu0 0.0
    %2181 = vmatprep.subr.mxu0 0.0
    %2182 = vmatpush1.msra.mxu0 0.0
    %2183 = vmatprep.subr.mxu0 0.0
    %2184 = vmatpush1.msra.mxu0 0.0
    %2185 = vmatprep.subr.mxu0 0.0
    %2186 = vmatpush1.msra.mxu0 0.0
    %2187 = vmatprep.subr.mxu0 0.0
    %2188 = vmatpush1.msra.mxu0 0.0
    %2189 = vmatprep.subr.mxu0 0.0
    %2190 = vmatpush1.msra.mxu0 0.0
    %2191 = vmatprep.subr.mxu0 0.0
    %2192 = vmatpush1.msra.mxu0 0.0
    %2193 = vmatprep.subr.mxu0 0.0
    %2194 = vmatpush1.msra.mxu0 0.0
    %2195 = vmatprep.subr.mxu0 0.0
    %2196 = vmatpush1.msra.mxu0 0.0
    %2197 = vmatprep.subr.mxu0 0.0
    %2198 = vmatpush1.msra.mxu0 0.0
    %2199 = vmatprep.subr.mxu0 0.0
    %2200 = vmatpush1.msra.mxu0 0.0
    %2201 = vmatprep.subr.mxu0 0.0
    %2202 = vmatpush1.msra.mxu0 0.0
    %2203 = vmatprep.subr.mxu0 0.0
    %2204 = vmatpush1.msra.mxu0 0.0
    %2205 = vmatprep.subr.mxu0 0.0
    %2206 = vmatpush1.msra.mxu0 0.0
    %2207 = vmatprep.subr.mxu0 0.0
    %2208 = vmatpush1.msra.mxu0 0.0
    %2209 = vmatprep.subr.mxu0 0.0
    %2210 = vmatpush1.msra.mxu0 0.0
    %2211 = vmatprep.subr.mxu0 0.0
    %2212 = vmatpush1.msra.mxu0 0.0
    %2213 = vmatprep.subr.mxu0 0.0
    %2214 = vmatpush1.msra.mxu0 0.0
    %2215 = vmatprep.subr.mxu0 0.0
    %2216 = vmatpush1.msra.mxu0 0.0
    %2217 = vmatprep.mubr.f32.mxu0 0.0
    %v2218 = vand.u32 %v1776, 4294901760
    %2219 = vmatmul.mubr.f32.gmra.mrb[0].mxu0 %v2218
    %v2220 = vpop.f32.mrb[0].mxu0
    %v2221 = vadd.f32 %v2149, %v2220
    %v2222 = vpop.f32.mrb[0].mxu0
    %2223 = vdwg.mxu0
    %v2224 = vmul.f32 %v1129, %v2221
    %v2226 = vlaneseq
    %v2227 = vshrl.u32 %v2226, 7
    %v2228 = vsub.s32 0, %v2227
    %v2229 = vrot.slane %v19, %v2228
    %v2231 = vmul.f32 %v2224, %v2229
    %2232 = vst [vmem:[#allocation2] sm:$0xff] %v2231
    // Predicated region
    $region18: #{tpu_custom_call.1} parent=1 // pred_check
      _
    $region19: #{tpu_custom_call.1} parent=1 // pred_check_branch
      %2234 = sbr.rel (0) target = $region21
    $region20: #{tpu_custom_call.1} parent=1 // pred_region
      %s2236 = ssub.s32 128, 64
      %2237 = vsyncadd [#allocation3], %s2236
      %s2238 = sshll.u32 [#allocation2], 4
      %s2239 = int_to_ptr.vmem [resolvable:$true] %s2238
      %2244 = dma.vmem_to_hbm [thread:$0]  %s2239, 64, %s4, [#allocation3], 64, 64, 4
    $region21: #{tpu_custom_call.1} parent=1 // pred_fallthru
      _
    // Predicated region
    $region22: #{tpu_custom_call.1} parent=1 // pred_check
      _
    $region23: #{tpu_custom_call.1} parent=1 // pred_check_branch
      %2246 = sbr.rel (0) target = $region25
    $region24: #{tpu_custom_call.1} parent=1 // pred_region
      %2247 = dma.done [#allocation3], 128
    $region25: #{tpu_custom_call.1} parent=1 // pred_fallthru
      _
    %2248 = vsyncpa [#allocation3], 1

</llo_original>
